<compile_context>
chip_gen: v6e
topology: v6e:2x2x1
jax: 0.10.0
libtpu: 0.0.40
codegen_flags: <defaults>
</compile_context>

<pallas_src>
import jax
import jax.numpy as jnp
from jax.experimental import pallas as pl
from jax.experimental.pallas import tpu as pltpu

SUB = 8           # sublane multiple for row padding
OUT_LANES = 128   # lane-dense output slab width


def _round_up(x, m):
    return (x + m - 1) // m * m


class SetCriterionPallas:
    """JAX/Pallas port of SetCriterion.forward (single fused kernel)."""

    def __init__(self, num_classes, num_deg, eos_coef, losses):
        self.num_classes = int(num_classes)
        self.num_deg = int(num_deg)
        self.eos_coef = float(eos_coef)
        self.losses = list(losses)

    # loss-name -> (pred key, target key, num classes, no-object idx, loss key, err key)
    def _ce_head_specs(self):
        return {
            'labels': ('pred_logits', 'labels', self.num_classes + 1,
                       self.num_classes, 'loss_ce', 'class_error'),
            'quadrant': ('pred_quadrant', 'quadrant', 3, 2,
                         'loss_quadrant', 'quadrant_error'),
            'directions': ('pred_directions', 'directions', self.num_deg + 1,
                           self.num_deg, 'loss_directions', 'directions_error'),
            'ba': ('pred_ba', 'ba', self.num_deg + 1, self.num_deg,
                   'loss_ba', 'ba_error'),
        }

    # TODO(synk): Hungarian assignment (scipy linear_sum_assignment) has no Pallas
    # equivalent; a deterministic identity matching (query i <-> target i) is used.
    def matcher(self, outputs, targets):
        return [(jnp.arange(int(t['labels'].shape[0]), dtype=jnp.int32),) * 2
                for t in targets]

    def __call__(self, outputs, targets):
        specs = self._ce_head_specs()
        B = len(targets)
        pred_any = next(v for k, v in outputs.items() if k != 'aux_outputs')
        Q = int(pred_any.shape[1])
        N = B * Q
        Np = _round_up(max(N, SUB), SUB)

        # identity matching: number of matched queries per batch element
        n_per = [int(t['labels'].shape[0]) for t in targets]
        assert all(n <= Q for n in n_per), "more targets than queries (identity matcher)"
        tgt_lengths = [float(n) for n in n_per]

        if all('boxes' in t for t in targets):
            num_boxes = sum(int(t['boxes'].shape[0]) for t in targets)
        else:
            num_boxes = sum(n_per)
        num_boxes = max(float(num_boxes), 1.0)   # single host: world_size == 1
        inv_nb = 1.0 / num_boxes

        ce_losses = [l for l in self.losses if l in specs]
        need_card = 'cardinality' in self.losses
        need_boxes = 'boxes' in self.losses
        need_az = 'az' in self.losses
        need_el = 'el' in self.losses
        need_reg = need_boxes or need_az or need_el
        n_ce = len(ce_losses)

        # ------------------- host-side input assembly (static slices only) ----
        inputs = []
        ce_C, ce_noobj, ce_names = [], [], []

        def pad_rows(a):
            return jnp.pad(a, ((0, Np - N), (0, 0))) if Np > N else a

        for l in ce_losses:
            pk, tk, C, noobj, lname, ename = specs[l]
            lg = outputs[pk].reshape(N, C)         # keep native dtype (bf16 ok)
            inputs.append(pad_rows(lg))
            ce_C.append(C)
            ce_noobj.append(noobj)
            ce_names.append((lname, ename))

        card_idx = card_C = None
        if need_card:
            card_C = int(outputs['pred_logits'].shape[-1])
            if 'labels' in ce_losses:
                card_idx = ce_losses.index('labels')
            else:
                card_idx = len(inputs)
                inputs.append(pad_rows(outputs['pred_logits'].reshape(N, card_C)))

        tgt_idx = matched_idx = None
        if n_ce > 0:
            cols = []
            for l in ce_losses:
                _, tk, C, noobj, _, _ = specs[l]
                per_b = []
                for b, t in enumerate(targets):
                    lab = t[tk].astype(jnp.int32).reshape(-1)
                    per_b.append(jnp.concatenate(
                        [lab, jnp.full((Q - n_per[b],), noobj, jnp.int32)]))
                cols.append(jnp.concatenate(per_b).reshape(N, 1))
            tgt = jnp.concatenate(cols, axis=1)                      # [N, n_ce] i32
            tgt_idx = len(inputs)
            inputs.append(pad_rows(tgt))

            mm = jnp.concatenate(
                [jnp.concatenate([jnp.ones((nb,), jnp.float32),
                                  jnp.zeros((Q - nb,), jnp.float32)])
                 for nb in n_per]).reshape(N, 1)                      # matched mask
            matched_idx = len(inputs)
            inputs.append(pad_rows(mm))

        reg_idx = None
        M = sum(n_per)
        Mp = _round_up(max(M, 1), SUB)
        if need_reg:
            def gather_src(key, d):
                pieces = [outputs[key][b, :n_per[b]].reshape(n_per[b], d)
                          for b in range(B) if n_per[b] > 0]
                if not pieces:
                    return jnp.zeros((0, d), jnp.float32)
                return jnp.concatenate(pieces, axis=0).astype(jnp.float32)

            def gather_tgt(key, d):
                pieces = [targets[b][key].reshape(n_per[b], d).astype(jnp.float32)
                          for b in range(B) if n_per[b] > 0]
                if not pieces:
                    return jnp.zeros((0, d), jnp.float32)
                return jnp.concatenate(pieces, axis=0)

            if need_boxes:
                sbox, tbox = gather_src('pred_boxes', 4), gather_tgt('boxes', 4)
            else:
                sbox = jnp.full((M, 4), 0.5, jnp.float32)
                tbox = sbox
            if need_az:
                saz, taz = gather_src('pred_az', 1), gather_tgt('az', 1)
            else:
                saz = jnp.zeros((M, 1), jnp.float32)
                taz = saz
            if need_el:
                sel_, tel = gather_src('pred_el', 1), gather_tgt('el', 1)
            else:
                sel_ = jnp.zeros((M, 1), jnp.float32)
                tel = sel_
            rmask = jnp.ones((M, 1), jnp.float32)
            reg = jnp.concatenate([sbox, tbox, saz, taz, sel_, tel, rmask,
                                   jnp.zeros((M, 3), jnp.float32)], axis=1)  # [M,16]
            if Mp > M:
                # padded rows carry a dummy valid box so GIoU math stays finite; mask=0
                pad_row = jnp.concatenate([jnp.full((1, 8), 0.5, jnp.float32),
                                           jnp.zeros((1, 8), jnp.float32)], axis=1)
                reg = jnp.concatenate([reg, jnp.tile(pad_row, (Mp - M, 1))], axis=0)
            reg_idx = len(inputs)
            inputs.append(reg)

        # ------------------- output lane layout --------------------------------
        out_lane = {}
        for (lname, ename) in ce_names:
            out_lane[lname] = len(out_lane)
            out_lane[ename] = len(out_lane)
        if need_card:
            out_lane['cardinality_error'] = len(out_lane)
        if need_boxes:
            out_lane['loss_bbox'] = len(out_lane)
            out_lane['loss_giou'] = len(out_lane)
        if need_az:
            out_lane['loss_az'] = len(out_lane)
            out_lane['loss_az_mse'] = len(out_lane)
        if need_el:
            out_lane['loss_el'] = len(out_lane)
            out_lane['loss_el_mse'] = len(out_lane)
        if not out_lane:
            return {}

        eos = self.eos_coef

        # ------------------- the fused kernel ----------------------------------
        # TODO(synk): for large B*Q (real DETR / aux layers) add a row-axis grid with
        # a VMEM accumulator (>=512-row tiles) instead of a single whole-array block.
        def kernel(*refs):
            out_ref = refs[-1]
            lane_slab = jax.lax.broadcasted_iota(jnp.int32, (1, OUT_LANES), 1)
            slab = jnp.zeros((1, OUT_LANES), jnp.float32)

            def put(s, name, val):   # val is (1,1); broadcast into its lane
                return s + jnp.where(lane_slab == out_lane[name], val, 0.0)

            row = jax.lax.broadcasted_iota(jnp.int32, (Np, 1), 0)
            row_valid = (row < N).astype(jnp.float32)                # [Np,1]

            if n_ce > 0:
                tgt_all = refs[tgt_idx][...]                          # [Np,n_ce] i32
                matched = refs[matched_idx][...] * row_valid          # [Np,1]
                matched_count = jnp.sum(matched, keepdims=True)       # (1,1)

            for h in range(n_ce):
                C, noobj = ce_C[h], ce_noobj[h]
                lname, ename = ce_names[h]
                x = refs[h][...].astype(jnp.float32)                  # [Np,C]
                t = tgt_all[:, h:h + 1]                               # [Np,1]
                lane = jax.lax.broadcasted_iota(jnp.int32, (Np, C), 1)
                onehot = (lane == t).astype(jnp.float32)
                m = jnp.max(x, axis=-1, keepdims=True)
                lse = jnp.log(jnp.sum(jnp.exp(x - m), axis=-1, keepdims=True)) + m
                tgt_logit = jnp.sum(onehot * x, axis=-1, keepdims=True)
                # class weight: 1 everywhere, eos_coef on the no-object class
                w = jnp.where(t == noobj, eos, 1.0).astype(jnp.float32) * row_valid
                loss = (jnp.sum(w * (lse - tgt_logit), keepdims=True)
                        / jnp.sum(w, keepdims=True))                  # weighted mean CE
                # top-1 accuracy over matched rows (ties: target-logit == row max)
                correct = jnp.sum(matched * (tgt_logit >= m).astype(jnp.float32),
                                  keepdims=True)
                acc_pct = jnp.where(matched_count > 0.0,
                                    100.0 * correct / matched_count, 0.0)
                slab = put(slab, lname, loss)
                slab = put(slab, ename, 100.0 - acc_pct)

            if need_card:
                xc = refs[card_idx][...].astype(jnp.float32)          # [Np,C0]
                mc = jnp.max(xc, axis=-1, keepdims=True)
                # non-empty prediction <=> argmax != last (no-object) class
                nonempty = (xc[:, card_C - 1:card_C] < mc).astype(jnp.float32) * row_valid
                card_err = jnp.zeros((1, 1), jnp.float32)
                for b in range(B):
                    in_b = ((row >= b * Q) & (row < (b + 1) * Q)).astype(jnp.float32)
                    cnt = jnp.sum(nonempty * in_b, keepdims=True)
                    card_err = card_err + jnp.abs(cnt - tgt_lengths[b])
                slab = put(slab, 'cardinality_error', card_err / float(B))

            if need_reg:
                reg_v = refs[reg_idx][...]                            # [Mp,16]
                rmask = reg_v[:, 12:13]
                if need_boxes:
                    s = reg_v[:, 0:4]
                    tt = reg_v[:, 4:8]
                    l1 = jnp.sum(jnp.abs(s - tt) * rmask, keepdims=True)

                    def xyxy(b):
                        cx, cy, w_, h_ = b[:, 0:1], b[:, 1:2], b[:, 2:3], b[:, 3:4]
                        return cx - 0.5 * w_, cy - 0.5 * h_, cx + 0.5 * w_, cy + 0.5 * h_

                    sx1, sy1, sx2, sy2 = xyxy(s)
                    tx1, ty1, tx2, ty2 = xyxy(tt)
                    area_s = (sx2 - sx1) * (sy2 - sy1)
                    area_t = (tx2 - tx1) * (ty2 - ty1)
                    ix1 = jnp.maximum(sx1, tx1)
                    iy1 = jnp.maximum(sy1, ty1)
                    ix2 = jnp.minimum(sx2, tx2)
                    iy2 = jnp.minimum(sy2, ty2)
                    inter = jnp.maximum(ix2 - ix1, 0.0) * jnp.maximum(iy2 - iy1, 0.0)
                    union = area_s + area_t - inter
                    iou = inter / union
                    ex1 = jnp.minimum(sx1, tx1)
                    ey1 = jnp.minimum(sy1, ty1)
                    ex2 = jnp.maximum(sx2, tx2)
                    ey2 = jnp.maximum(sy2, ty2)
                    area_e = (ex2 - ex1) * (ey2 - ey1)
                    giou = iou - (area_e - union) / area_e            # torchvision: no eps
                    slab = put(slab, 'loss_bbox', l1 * inv_nb)
                    slab = put(slab, 'loss_giou',
                               jnp.sum((1.0 - giou) * rmask, keepdims=True) * inv_nb)
                if need_az:
                    d = reg_v[:, 8:9] - reg_v[:, 9:10]
                    slab = put(slab, 'loss_az',
                               jnp.sum(jnp.abs(d) * rmask, keepdims=True) * inv_nb)
                    slab = put(slab, 'loss_az_mse',
                               jnp.sum(d * d * rmask, keepdims=True) * inv_nb)
                if need_el:
                    d = reg_v[:, 10:11] - reg_v[:, 11:12]
                    slab = put(slab, 'loss_el',
                               jnp.sum(jnp.abs(d) * rmask, keepdims=True) * inv_nb)
                    slab = put(slab, 'loss_el_mse',
                               jnp.sum(d * d * rmask, keepdims=True) * inv_nb)

            out_ref[...] = slab

        vmem = pl.BlockSpec(memory_space=pltpu.MemorySpace.VMEM)
        slab = pl.pallas_call(
            kernel,
            in_specs=[vmem] * len(inputs),
            out_specs=vmem,
            out_shape=jax.ShapeDtypeStruct((1, OUT_LANES), jnp.float32),
        )(*inputs)

        return {name: slab[0, lane] for name, lane in out_lane.items()}


# --------------------------------- demo ---------------------------------------

if __name__ == "__main__":
    key = jax.random.PRNGKey(0)
    B, Q = 2, 8
    num_classes, num_deg = 4, 8
    keys = jax.random.split(key, 16)

    outputs = {
        'pred_logits':     jax.random.normal(keys[0], (B, Q, num_classes + 1), jnp.float32),
        'pred_boxes':      jax.nn.sigmoid(jax.random.normal(keys[1], (B, Q, 4), jnp.float32)),
        'pred_quadrant':   jax.random.normal(keys[2], (B, Q, 3), jnp.float32),
        'pred_directions': jax.random.normal(keys[3], (B, Q, num_deg + 1), jnp.float32),
        'pred_ba':         jax.random.normal(keys[4], (B, Q, num_deg + 1), jnp.float32),
        'pred_az':         jax.random.normal(keys[5], (B, Q, 1), jnp.float32),
        'pred_el':         jax.random.normal(keys[6], (B, Q, 1), jnp.float32),
    }

    def make_target(k, n):
        ks = jax.random.split(k, 8)
        cxcy = jax.random.uniform(ks[0], (n, 2), minval=0.25, maxval=0.75)
        wh = jax.random.uniform(ks[1], (n, 2), minval=0.10, maxval=0.30)
        return {
            'labels':     jax.random.randint(ks[2], (n,), 0, num_classes),
            'boxes':      jnp.concatenate([cxcy, wh], axis=1).astype(jnp.float32),
            'quadrant':   jax.random.randint(ks[3], (n,), 0, 2),
            'directions': jax.random.randint(ks[4], (n,), 0, num_deg),
            'ba':         jax.random.randint(ks[5], (n,), 0, num_deg),
            'az':         jax.random.uniform(ks[6], (n, 1), dtype=jnp.float32),
            'el':         jax.random.uniform(ks[7], (n, 1), dtype=jnp.float32),
        }

    targets = [make_target(keys[7], 3), make_target(keys[8], 2)]

    criterion = SetCriterionPallas(
        num_classes=num_classes, num_deg=num_deg, eos_coef=0.1,
        losses=['labels', 'cardinality', 'boxes', 'quadrant', 'directions',
                'ba', 'az', 'el'])

    losses = criterion(outputs, targets)
    losses = jax.tree_util.tree_map(jax.block_until_ready, losses)

    for v in losses.values():
        assert bool(jnp.isfinite(v)), "non-finite loss"
    print("KERNEL_OK")
</pallas_src>

<mosaic_0001>
module attributes {stable_mosaic.version = 11 : i64} {
  func.func @kernel(%arg0: memref<16x5xf32, #tpu.memory_space<vmem>>, %arg1: memref<16x3xf32, #tpu.memory_space<vmem>>, %arg2: memref<16x9xf32, #tpu.memory_space<vmem>>, %arg3: memref<16x9xf32, #tpu.memory_space<vmem>>, %arg4: memref<16x4xi32, #tpu.memory_space<vmem>>, %arg5: memref<16x1xf32, #tpu.memory_space<vmem>>, %arg6: memref<8x16xf32, #tpu.memory_space<vmem>>, %arg7: memref<1x128xf32, #tpu.memory_space<vmem>>) attributes {dimension_semantics = [], scalar_prefetch = 0 : i64, scratch_operands = 0 : i64, tpu.core_type = #tpu.core_type<tc>} {
    %0 = tpu.iota {dimensions = array<i32: 1>} : vector<1x128xi32>
    %cst = arith.constant 0.000000e+00 : f32
    %1 = vector.broadcast %cst : f32 to vector<1x128xf32>
    %2 = tpu.iota {dimensions = array<i32: 0>} : vector<16x1xi32>
    %c16_i32 = arith.constant 16 : i32
    %3 = vector.broadcast %c16_i32 : i32 to vector<16x1xi32>
    %4 = arith.cmpi slt, %2, %3 : vector<16x1xi32>
    %5 = arith.extui %4 : vector<16x1xi1> to vector<16x1xi32>
    %6 = arith.sitofp %5 : vector<16x1xi32> to vector<16x1xf32>
    %c0 = arith.constant 0 : index
    %c0_0 = arith.constant 0 : index
    %7 = vector.load %arg4[%c0, %c0_0] : memref<16x4xi32, #tpu.memory_space<vmem>>, vector<16x4xi32>
    %c0_1 = arith.constant 0 : index
    %c0_2 = arith.constant 0 : index
    %8 = vector.load %arg5[%c0_1, %c0_2] : memref<16x1xf32, #tpu.memory_space<vmem>>, vector<16x1xf32>
    %9 = arith.mulf %8, %6 : vector<16x1xf32>
    %10 = vector.shape_cast %9 : vector<16x1xf32> to vector<1x16x1xf32>
    %cst_3 = arith.constant dense<0.000000e+00> : vector<1xf32>
    %11 = vector.multi_reduction <add>, %10, %cst_3 [1, 2] : vector<1x16x1xf32> to vector<1xf32>
    %12 = vector.shape_cast %11 : vector<1xf32> to vector<1x1x1xf32>
    %13 = vector.extract %12[0, 0, 0] : f32 from vector<1x1x1xf32>
    %14 = vector.broadcast %13 : f32 to vector<1x1xf32>
    %c0_4 = arith.constant 0 : index
    %c0_5 = arith.constant 0 : index
    %15 = vector.load %arg0[%c0_4, %c0_5] : memref<16x5xf32, #tpu.memory_space<vmem>>, vector<16x5xf32>
    %16 = vector.extract_strided_slice %7 {offsets = [0, 0], sizes = [16, 1], strides = [1, 1]} : vector<16x4xi32> to vector<16x1xi32>
    %17 = tpu.iota {dimensions = array<i32: 1>} : vector<16x5xi32>
    %18 = vector.broadcast %16 : vector<16x1xi32> to vector<16x5xi32>
    %19 = arith.cmpi eq, %17, %18 : vector<16x5xi32>
    %20 = arith.extui %19 : vector<16x5xi1> to vector<16x5xi32>
    %21 = arith.sitofp %20 : vector<16x5xi32> to vector<16x5xf32>
    %cst_6 = arith.constant dense<0xFF800000> : vector<16xf32>
    %22 = vector.multi_reduction <maximumf>, %15, %cst_6 [1] : vector<16x5xf32> to vector<16xf32>
    %23 = vector.shape_cast %22 : vector<16xf32> to vector<16x1xf32>
    %24 = vector.broadcast %23 : vector<16x1xf32> to vector<16x5xf32>
    %25 = arith.subf %15, %24 : vector<16x5xf32>
    %26 = math.exp %25 : vector<16x5xf32>
    %cst_7 = arith.constant dense<0.000000e+00> : vector<16xf32>
    %27 = vector.multi_reduction <add>, %26, %cst_7 [1] : vector<16x5xf32> to vector<16xf32>
    %28 = vector.shape_cast %27 : vector<16xf32> to vector<16x1xf32>
    %29 = math.log %28 : vector<16x1xf32>
    %30 = arith.addf %29, %23 : vector<16x1xf32>
    %31 = arith.mulf %21, %15 : vector<16x5xf32>
    %cst_8 = arith.constant dense<0.000000e+00> : vector<16xf32>
    %32 = vector.multi_reduction <add>, %31, %cst_8 [1] : vector<16x5xf32> to vector<16xf32>
    %33 = vector.shape_cast %32 : vector<16xf32> to vector<16x1xf32>
    %c4_i32 = arith.constant 4 : i32
    %34 = vector.broadcast %c4_i32 : i32 to vector<16x1xi32>
    %35 = arith.cmpi eq, %16, %34 : vector<16x1xi32>
    %cst_9 = arith.constant 1.000000e-01 : f32
    %cst_10 = arith.constant 1.000000e+00 : f32
    %36 = vector.broadcast %cst_9 : f32 to vector<16x1xf32>
    %37 = vector.broadcast %cst_10 : f32 to vector<16x1xf32>
    %38 = arith.select %35, %36, %37 : vector<16x1xi1>, vector<16x1xf32>
    %39 = arith.mulf %38, %6 : vector<16x1xf32>
    %40 = arith.subf %30, %33 : vector<16x1xf32>
    %41 = arith.mulf %39, %40 : vector<16x1xf32>
    %42 = vector.shape_cast %41 : vector<16x1xf32> to vector<1x16x1xf32>
    %cst_11 = arith.constant dense<0.000000e+00> : vector<1xf32>
    %43 = vector.multi_reduction <add>, %42, %cst_11 [1, 2] : vector<1x16x1xf32> to vector<1xf32>
    %44 = vector.shape_cast %43 : vector<1xf32> to vector<1x1x1xf32>
    %45 = vector.extract %44[0, 0, 0] : f32 from vector<1x1x1xf32>
    %46 = vector.broadcast %45 : f32 to vector<1x1xf32>
    %47 = vector.shape_cast %39 : vector<16x1xf32> to vector<1x16x1xf32>
    %cst_12 = arith.constant dense<0.000000e+00> : vector<1xf32>
    %48 = vector.multi_reduction <add>, %47, %cst_12 [1, 2] : vector<1x16x1xf32> to vector<1xf32>
    %49 = vector.shape_cast %48 : vector<1xf32> to vector<1x1x1xf32>
    %50 = vector.extract %49[0, 0, 0] : f32 from vector<1x1x1xf32>
    %51 = vector.broadcast %50 : f32 to vector<1x1xf32>
    %52 = arith.divf %46, %51 : vector<1x1xf32>
    %53 = arith.cmpf oge, %33, %23 : vector<16x1xf32>
    %54 = arith.extui %53 : vector<16x1xi1> to vector<16x1xi32>
    %55 = arith.sitofp %54 : vector<16x1xi32> to vector<16x1xf32>
    %56 = arith.mulf %9, %55 : vector<16x1xf32>
    %57 = vector.shape_cast %56 : vector<16x1xf32> to vector<1x16x1xf32>
    %cst_13 = arith.constant dense<0.000000e+00> : vector<1xf32>
    %58 = vector.multi_reduction <add>, %57, %cst_13 [1, 2] : vector<1x16x1xf32> to vector<1xf32>
    %59 = vector.shape_cast %58 : vector<1xf32> to vector<1x1x1xf32>
    %60 = vector.extract %59[0, 0, 0] : f32 from vector<1x1x1xf32>
    %61 = vector.broadcast %60 : f32 to vector<1x1xf32>
    %cst_14 = arith.constant 0.000000e+00 : f32
    %62 = vector.broadcast %cst_14 : f32 to vector<1x1xf32>
    %63 = arith.cmpf ogt, %14, %62 : vector<1x1xf32>
    %cst_15 = arith.constant 1.000000e+02 : f32
    %64 = vector.broadcast %cst_15 : f32 to vector<1x1xf32>
    %65 = arith.mulf %64, %61 : vector<1x1xf32>
    %66 = arith.divf %65, %14 : vector<1x1xf32>
    %cst_16 = arith.constant 0.000000e+00 : f32
    %67 = vector.broadcast %cst_16 : f32 to vector<1x1xf32>
    %68 = arith.select %63, %66, %67 : vector<1x1xi1>, vector<1x1xf32>
    %c0_i32 = arith.constant 0 : i32
    %69 = vector.broadcast %c0_i32 : i32 to vector<1x128xi32>
    %70 = arith.cmpi eq, %0, %69 : vector<1x128xi32>
    %cst_17 = arith.constant 0.000000e+00 : f32
    %71 = vector.shape_cast %52 : vector<1x1xf32> to vector<1x1xf32>
    %72 = vector.broadcast %71 : vector<1x1xf32> to vector<1x128xf32>
    %73 = vector.broadcast %cst_17 : f32 to vector<1x128xf32>
    %74 = arith.select %70, %72, %73 : vector<1x128xi1>, vector<1x128xf32>
    %75 = arith.addf %1, %74 : vector<1x128xf32>
    %cst_18 = arith.constant 1.000000e+02 : f32
    %76 = vector.broadcast %cst_18 : f32 to vector<1x1xf32>
    %77 = arith.subf %76, %68 : vector<1x1xf32>
    %c1_i32 = arith.constant 1 : i32
    %78 = vector.broadcast %c1_i32 : i32 to vector<1x128xi32>
    %79 = arith.cmpi eq, %0, %78 : vector<1x128xi32>
    %cst_19 = arith.constant 0.000000e+00 : f32
    %80 = vector.shape_cast %77 : vector<1x1xf32> to vector<1x1xf32>
    %81 = vector.broadcast %80 : vector<1x1xf32> to vector<1x128xf32>
    %82 = vector.broadcast %cst_19 : f32 to vector<1x128xf32>
    %83 = arith.select %79, %81, %82 : vector<1x128xi1>, vector<1x128xf32>
    %84 = arith.addf %75, %83 : vector<1x128xf32>
    %c0_20 = arith.constant 0 : index
    %c0_21 = arith.constant 0 : index
    %85 = vector.load %arg1[%c0_20, %c0_21] : memref<16x3xf32, #tpu.memory_space<vmem>>, vector<16x3xf32>
    %86 = vector.extract_strided_slice %7 {offsets = [0, 1], sizes = [16, 1], strides = [1, 1]} : vector<16x4xi32> to vector<16x1xi32>
    %87 = tpu.iota {dimensions = array<i32: 1>} : vector<16x3xi32>
    %88 = vector.broadcast %86 : vector<16x1xi32> to vector<16x3xi32>
    %89 = arith.cmpi eq, %87, %88 : vector<16x3xi32>
    %90 = arith.extui %89 : vector<16x3xi1> to vector<16x3xi32>
    %91 = arith.sitofp %90 : vector<16x3xi32> to vector<16x3xf32>
    %cst_22 = arith.constant dense<0xFF800000> : vector<16xf32>
    %92 = vector.multi_reduction <maximumf>, %85, %cst_22 [1] : vector<16x3xf32> to vector<16xf32>
    %93 = vector.shape_cast %92 : vector<16xf32> to vector<16x1xf32>
    %94 = vector.broadcast %93 : vector<16x1xf32> to vector<16x3xf32>
    %95 = arith.subf %85, %94 : vector<16x3xf32>
    %96 = math.exp %95 : vector<16x3xf32>
    %cst_23 = arith.constant dense<0.000000e+00> : vector<16xf32>
    %97 = vector.multi_reduction <add>, %96, %cst_23 [1] : vector<16x3xf32> to vector<16xf32>
    %98 = vector.shape_cast %97 : vector<16xf32> to vector<16x1xf32>
    %99 = math.log %98 : vector<16x1xf32>
    %100 = arith.addf %99, %93 : vector<16x1xf32>
    %101 = arith.mulf %91, %85 : vector<16x3xf32>
    %cst_24 = arith.constant dense<0.000000e+00> : vector<16xf32>
    %102 = vector.multi_reduction <add>, %101, %cst_24 [1] : vector<16x3xf32> to vector<16xf32>
    %103 = vector.shape_cast %102 : vector<16xf32> to vector<16x1xf32>
    %c2_i32 = arith.constant 2 : i32
    %104 = vector.broadcast %c2_i32 : i32 to vector<16x1xi32>
    %105 = arith.cmpi eq, %86, %104 : vector<16x1xi32>
    %cst_25 = arith.constant 1.000000e-01 : f32
    %cst_26 = arith.constant 1.000000e+00 : f32
    %106 = vector.broadcast %cst_25 : f32 to vector<16x1xf32>
    %107 = vector.broadcast %cst_26 : f32 to vector<16x1xf32>
    %108 = arith.select %105, %106, %107 : vector<16x1xi1>, vector<16x1xf32>
    %109 = arith.mulf %108, %6 : vector<16x1xf32>
    %110 = arith.subf %100, %103 : vector<16x1xf32>
    %111 = arith.mulf %109, %110 : vector<16x1xf32>
    %112 = vector.shape_cast %111 : vector<16x1xf32> to vector<1x16x1xf32>
    %cst_27 = arith.constant dense<0.000000e+00> : vector<1xf32>
    %113 = vector.multi_reduction <add>, %112, %cst_27 [1, 2] : vector<1x16x1xf32> to vector<1xf32>
    %114 = vector.shape_cast %113 : vector<1xf32> to vector<1x1x1xf32>
    %115 = vector.extract %114[0, 0, 0] : f32 from vector<1x1x1xf32>
    %116 = vector.broadcast %115 : f32 to vector<1x1xf32>
    %117 = vector.shape_cast %109 : vector<16x1xf32> to vector<1x16x1xf32>
    %cst_28 = arith.constant dense<0.000000e+00> : vector<1xf32>
    %118 = vector.multi_reduction <add>, %117, %cst_28 [1, 2] : vector<1x16x1xf32> to vector<1xf32>
    %119 = vector.shape_cast %118 : vector<1xf32> to vector<1x1x1xf32>
    %120 = vector.extract %119[0, 0, 0] : f32 from vector<1x1x1xf32>
    %121 = vector.broadcast %120 : f32 to vector<1x1xf32>
    %122 = arith.divf %116, %121 : vector<1x1xf32>
    %123 = arith.cmpf oge, %103, %93 : vector<16x1xf32>
    %124 = arith.extui %123 : vector<16x1xi1> to vector<16x1xi32>
    %125 = arith.sitofp %124 : vector<16x1xi32> to vector<16x1xf32>
    %126 = arith.mulf %9, %125 : vector<16x1xf32>
    %127 = vector.shape_cast %126 : vector<16x1xf32> to vector<1x16x1xf32>
    %cst_29 = arith.constant dense<0.000000e+00> : vector<1xf32>
    %128 = vector.multi_reduction <add>, %127, %cst_29 [1, 2] : vector<1x16x1xf32> to vector<1xf32>
    %129 = vector.shape_cast %128 : vector<1xf32> to vector<1x1x1xf32>
    %130 = vector.extract %129[0, 0, 0] : f32 from vector<1x1x1xf32>
    %131 = vector.broadcast %130 : f32 to vector<1x1xf32>
    %cst_30 = arith.constant 0.000000e+00 : f32
    %132 = vector.broadcast %cst_30 : f32 to vector<1x1xf32>
    %133 = arith.cmpf ogt, %14, %132 : vector<1x1xf32>
    %cst_31 = arith.constant 1.000000e+02 : f32
    %134 = vector.broadcast %cst_31 : f32 to vector<1x1xf32>
    %135 = arith.mulf %134, %131 : vector<1x1xf32>
    %136 = arith.divf %135, %14 : vector<1x1xf32>
    %cst_32 = arith.constant 0.000000e+00 : f32
    %137 = vector.broadcast %cst_32 : f32 to vector<1x1xf32>
    %138 = arith.select %133, %136, %137 : vector<1x1xi1>, vector<1x1xf32>
    %c2_i32_33 = arith.constant 2 : i32
    %139 = vector.broadcast %c2_i32_33 : i32 to vector<1x128xi32>
    %140 = arith.cmpi eq, %0, %139 : vector<1x128xi32>
    %cst_34 = arith.constant 0.000000e+00 : f32
    %141 = vector.shape_cast %122 : vector<1x1xf32> to vector<1x1xf32>
    %142 = vector.broadcast %141 : vector<1x1xf32> to vector<1x128xf32>
    %143 = vector.broadcast %cst_34 : f32 to vector<1x128xf32>
    %144 = arith.select %140, %142, %143 : vector<1x128xi1>, vector<1x128xf32>
    %145 = arith.addf %84, %144 : vector<1x128xf32>
    %cst_35 = arith.constant 1.000000e+02 : f32
    %146 = vector.broadcast %cst_35 : f32 to vector<1x1xf32>
    %147 = arith.subf %146, %138 : vector<1x1xf32>
    %c3_i32 = arith.constant 3 : i32
    %148 = vector.broadcast %c3_i32 : i32 to vector<1x128xi32>
    %149 = arith.cmpi eq, %0, %148 : vector<1x128xi32>
    %cst_36 = arith.constant 0.000000e+00 : f32
    %150 = vector.shape_cast %147 : vector<1x1xf32> to vector<1x1xf32>
    %151 = vector.broadcast %150 : vector<1x1xf32> to vector<1x128xf32>
    %152 = vector.broadcast %cst_36 : f32 to vector<1x128xf32>
    %153 = arith.select %149, %151, %152 : vector<1x128xi1>, vector<1x128xf32>
    %154 = arith.addf %145, %153 : vector<1x128xf32>
    %c0_37 = arith.constant 0 : index
    %c0_38 = arith.constant 0 : index
    %155 = vector.load %arg2[%c0_37, %c0_38] : memref<16x9xf32, #tpu.memory_space<vmem>>, vector<16x9xf32>
    %156 = vector.extract_strided_slice %7 {offsets = [0, 2], sizes = [16, 1], strides = [1, 1]} : vector<16x4xi32> to vector<16x1xi32>
    %157 = tpu.iota {dimensions = array<i32: 1>} : vector<16x9xi32>
    %158 = vector.broadcast %156 : vector<16x1xi32> to vector<16x9xi32>
    %159 = arith.cmpi eq, %157, %158 : vector<16x9xi32>
    %160 = arith.extui %159 : vector<16x9xi1> to vector<16x9xi32>
    %161 = arith.sitofp %160 : vector<16x9xi32> to vector<16x9xf32>
    %cst_39 = arith.constant dense<0xFF800000> : vector<16xf32>
    %162 = vector.multi_reduction <maximumf>, %155, %cst_39 [1] : vector<16x9xf32> to vector<16xf32>
    %163 = vector.shape_cast %162 : vector<16xf32> to vector<16x1xf32>
    %164 = vector.broadcast %163 : vector<16x1xf32> to vector<16x9xf32>
    %165 = arith.subf %155, %164 : vector<16x9xf32>
    %166 = math.exp %165 : vector<16x9xf32>
    %cst_40 = arith.constant dense<0.000000e+00> : vector<16xf32>
    %167 = vector.multi_reduction <add>, %166, %cst_40 [1] : vector<16x9xf32> to vector<16xf32>
    %168 = vector.shape_cast %167 : vector<16xf32> to vector<16x1xf32>
    %169 = math.log %168 : vector<16x1xf32>
    %170 = arith.addf %169, %163 : vector<16x1xf32>
    %171 = arith.mulf %161, %155 : vector<16x9xf32>
    %cst_41 = arith.constant dense<0.000000e+00> : vector<16xf32>
    %172 = vector.multi_reduction <add>, %171, %cst_41 [1] : vector<16x9xf32> to vector<16xf32>
    %173 = vector.shape_cast %172 : vector<16xf32> to vector<16x1xf32>
    %c8_i32 = arith.constant 8 : i32
    %174 = vector.broadcast %c8_i32 : i32 to vector<16x1xi32>
    %175 = arith.cmpi eq, %156, %174 : vector<16x1xi32>
    %cst_42 = arith.constant 1.000000e-01 : f32
    %cst_43 = arith.constant 1.000000e+00 : f32
    %176 = vector.broadcast %cst_42 : f32 to vector<16x1xf32>
    %177 = vector.broadcast %cst_43 : f32 to vector<16x1xf32>
    %178 = arith.select %175, %176, %177 : vector<16x1xi1>, vector<16x1xf32>
    %179 = arith.mulf %178, %6 : vector<16x1xf32>
    %180 = arith.subf %170, %173 : vector<16x1xf32>
    %181 = arith.mulf %179, %180 : vector<16x1xf32>
    %182 = vector.shape_cast %181 : vector<16x1xf32> to vector<1x16x1xf32>
    %cst_44 = arith.constant dense<0.000000e+00> : vector<1xf32>
    %183 = vector.multi_reduction <add>, %182, %cst_44 [1, 2] : vector<1x16x1xf32> to vector<1xf32>
    %184 = vector.shape_cast %183 : vector<1xf32> to vector<1x1x1xf32>
    %185 = vector.extract %184[0, 0, 0] : f32 from vector<1x1x1xf32>
    %186 = vector.broadcast %185 : f32 to vector<1x1xf32>
    %187 = vector.shape_cast %179 : vector<16x1xf32> to vector<1x16x1xf32>
    %cst_45 = arith.constant dense<0.000000e+00> : vector<1xf32>
    %188 = vector.multi_reduction <add>, %187, %cst_45 [1, 2] : vector<1x16x1xf32> to vector<1xf32>
    %189 = vector.shape_cast %188 : vector<1xf32> to vector<1x1x1xf32>
    %190 = vector.extract %189[0, 0, 0] : f32 from vector<1x1x1xf32>
    %191 = vector.broadcast %190 : f32 to vector<1x1xf32>
    %192 = arith.divf %186, %191 : vector<1x1xf32>
    %193 = arith.cmpf oge, %173, %163 : vector<16x1xf32>
    %194 = arith.extui %193 : vector<16x1xi1> to vector<16x1xi32>
    %195 = arith.sitofp %194 : vector<16x1xi32> to vector<16x1xf32>
    %196 = arith.mulf %9, %195 : vector<16x1xf32>
    %197 = vector.shape_cast %196 : vector<16x1xf32> to vector<1x16x1xf32>
    %cst_46 = arith.constant dense<0.000000e+00> : vector<1xf32>
    %198 = vector.multi_reduction <add>, %197, %cst_46 [1, 2] : vector<1x16x1xf32> to vector<1xf32>
    %199 = vector.shape_cast %198 : vector<1xf32> to vector<1x1x1xf32>
    %200 = vector.extract %199[0, 0, 0] : f32 from vector<1x1x1xf32>
    %201 = vector.broadcast %200 : f32 to vector<1x1xf32>
    %cst_47 = arith.constant 0.000000e+00 : f32
    %202 = vector.broadcast %cst_47 : f32 to vector<1x1xf32>
    %203 = arith.cmpf ogt, %14, %202 : vector<1x1xf32>
    %cst_48 = arith.constant 1.000000e+02 : f32
    %204 = vector.broadcast %cst_48 : f32 to vector<1x1xf32>
    %205 = arith.mulf %204, %201 : vector<1x1xf32>
    %206 = arith.divf %205, %14 : vector<1x1xf32>
    %cst_49 = arith.constant 0.000000e+00 : f32
    %207 = vector.broadcast %cst_49 : f32 to vector<1x1xf32>
    %208 = arith.select %203, %206, %207 : vector<1x1xi1>, vector<1x1xf32>
    %c4_i32_50 = arith.constant 4 : i32
    %209 = vector.broadcast %c4_i32_50 : i32 to vector<1x128xi32>
    %210 = arith.cmpi eq, %0, %209 : vector<1x128xi32>
    %cst_51 = arith.constant 0.000000e+00 : f32
    %211 = vector.shape_cast %192 : vector<1x1xf32> to vector<1x1xf32>
    %212 = vector.broadcast %211 : vector<1x1xf32> to vector<1x128xf32>
    %213 = vector.broadcast %cst_51 : f32 to vector<1x128xf32>
    %214 = arith.select %210, %212, %213 : vector<1x128xi1>, vector<1x128xf32>
    %215 = arith.addf %154, %214 : vector<1x128xf32>
    %cst_52 = arith.constant 1.000000e+02 : f32
    %216 = vector.broadcast %cst_52 : f32 to vector<1x1xf32>
    %217 = arith.subf %216, %208 : vector<1x1xf32>
    %c5_i32 = arith.constant 5 : i32
    %218 = vector.broadcast %c5_i32 : i32 to vector<1x128xi32>
    %219 = arith.cmpi eq, %0, %218 : vector<1x128xi32>
    %cst_53 = arith.constant 0.000000e+00 : f32
    %220 = vector.shape_cast %217 : vector<1x1xf32> to vector<1x1xf32>
    %221 = vector.broadcast %220 : vector<1x1xf32> to vector<1x128xf32>
    %222 = vector.broadcast %cst_53 : f32 to vector<1x128xf32>
    %223 = arith.select %219, %221, %222 : vector<1x128xi1>, vector<1x128xf32>
    %224 = arith.addf %215, %223 : vector<1x128xf32>
    %c0_54 = arith.constant 0 : index
    %c0_55 = arith.constant 0 : index
    %225 = vector.load %arg3[%c0_54, %c0_55] : memref<16x9xf32, #tpu.memory_space<vmem>>, vector<16x9xf32>
    %226 = vector.extract_strided_slice %7 {offsets = [0, 3], sizes = [16, 1], strides = [1, 1]} : vector<16x4xi32> to vector<16x1xi32>
    %227 = tpu.iota {dimensions = array<i32: 1>} : vector<16x9xi32>
    %228 = vector.broadcast %226 : vector<16x1xi32> to vector<16x9xi32>
    %229 = arith.cmpi eq, %227, %228 : vector<16x9xi32>
    %230 = arith.extui %229 : vector<16x9xi1> to vector<16x9xi32>
    %231 = arith.sitofp %230 : vector<16x9xi32> to vector<16x9xf32>
    %cst_56 = arith.constant dense<0xFF800000> : vector<16xf32>
    %232 = vector.multi_reduction <maximumf>, %225, %cst_56 [1] : vector<16x9xf32> to vector<16xf32>
    %233 = vector.shape_cast %232 : vector<16xf32> to vector<16x1xf32>
    %234 = vector.broadcast %233 : vector<16x1xf32> to vector<16x9xf32>
    %235 = arith.subf %225, %234 : vector<16x9xf32>
    %236 = math.exp %235 : vector<16x9xf32>
    %cst_57 = arith.constant dense<0.000000e+00> : vector<16xf32>
    %237 = vector.multi_reduction <add>, %236, %cst_57 [1] : vector<16x9xf32> to vector<16xf32>
    %238 = vector.shape_cast %237 : vector<16xf32> to vector<16x1xf32>
    %239 = math.log %238 : vector<16x1xf32>
    %240 = arith.addf %239, %233 : vector<16x1xf32>
    %241 = arith.mulf %231, %225 : vector<16x9xf32>
    %cst_58 = arith.constant dense<0.000000e+00> : vector<16xf32>
    %242 = vector.multi_reduction <add>, %241, %cst_58 [1] : vector<16x9xf32> to vector<16xf32>
    %243 = vector.shape_cast %242 : vector<16xf32> to vector<16x1xf32>
    %c8_i32_59 = arith.constant 8 : i32
    %244 = vector.broadcast %c8_i32_59 : i32 to vector<16x1xi32>
    %245 = arith.cmpi eq, %226, %244 : vector<16x1xi32>
    %cst_60 = arith.constant 1.000000e-01 : f32
    %cst_61 = arith.constant 1.000000e+00 : f32
    %246 = vector.broadcast %cst_60 : f32 to vector<16x1xf32>
    %247 = vector.broadcast %cst_61 : f32 to vector<16x1xf32>
    %248 = arith.select %245, %246, %247 : vector<16x1xi1>, vector<16x1xf32>
    %249 = arith.mulf %248, %6 : vector<16x1xf32>
    %250 = arith.subf %240, %243 : vector<16x1xf32>
    %251 = arith.mulf %249, %250 : vector<16x1xf32>
    %252 = vector.shape_cast %251 : vector<16x1xf32> to vector<1x16x1xf32>
    %cst_62 = arith.constant dense<0.000000e+00> : vector<1xf32>
    %253 = vector.multi_reduction <add>, %252, %cst_62 [1, 2] : vector<1x16x1xf32> to vector<1xf32>
    %254 = vector.shape_cast %253 : vector<1xf32> to vector<1x1x1xf32>
    %255 = vector.extract %254[0, 0, 0] : f32 from vector<1x1x1xf32>
    %256 = vector.broadcast %255 : f32 to vector<1x1xf32>
    %257 = vector.shape_cast %249 : vector<16x1xf32> to vector<1x16x1xf32>
    %cst_63 = arith.constant dense<0.000000e+00> : vector<1xf32>
    %258 = vector.multi_reduction <add>, %257, %cst_63 [1, 2] : vector<1x16x1xf32> to vector<1xf32>
    %259 = vector.shape_cast %258 : vector<1xf32> to vector<1x1x1xf32>
    %260 = vector.extract %259[0, 0, 0] : f32 from vector<1x1x1xf32>
    %261 = vector.broadcast %260 : f32 to vector<1x1xf32>
    %262 = arith.divf %256, %261 : vector<1x1xf32>
    %263 = arith.cmpf oge, %243, %233 : vector<16x1xf32>
    %264 = arith.extui %263 : vector<16x1xi1> to vector<16x1xi32>
    %265 = arith.sitofp %264 : vector<16x1xi32> to vector<16x1xf32>
    %266 = arith.mulf %9, %265 : vector<16x1xf32>
    %267 = vector.shape_cast %266 : vector<16x1xf32> to vector<1x16x1xf32>
    %cst_64 = arith.constant dense<0.000000e+00> : vector<1xf32>
    %268 = vector.multi_reduction <add>, %267, %cst_64 [1, 2] : vector<1x16x1xf32> to vector<1xf32>
    %269 = vector.shape_cast %268 : vector<1xf32> to vector<1x1x1xf32>
    %270 = vector.extract %269[0, 0, 0] : f32 from vector<1x1x1xf32>
    %271 = vector.broadcast %270 : f32 to vector<1x1xf32>
    %cst_65 = arith.constant 0.000000e+00 : f32
    %272 = vector.broadcast %cst_65 : f32 to vector<1x1xf32>
    %273 = arith.cmpf ogt, %14, %272 : vector<1x1xf32>
    %cst_66 = arith.constant 1.000000e+02 : f32
    %274 = vector.broadcast %cst_66 : f32 to vector<1x1xf32>
    %275 = arith.mulf %274, %271 : vector<1x1xf32>
    %276 = arith.divf %275, %14 : vector<1x1xf32>
    %cst_67 = arith.constant 0.000000e+00 : f32
    %277 = vector.broadcast %cst_67 : f32 to vector<1x1xf32>
    %278 = arith.select %273, %276, %277 : vector<1x1xi1>, vector<1x1xf32>
    %c6_i32 = arith.constant 6 : i32
    %279 = vector.broadcast %c6_i32 : i32 to vector<1x128xi32>
    %280 = arith.cmpi eq, %0, %279 : vector<1x128xi32>
    %cst_68 = arith.constant 0.000000e+00 : f32
    %281 = vector.shape_cast %262 : vector<1x1xf32> to vector<1x1xf32>
    %282 = vector.broadcast %281 : vector<1x1xf32> to vector<1x128xf32>
    %283 = vector.broadcast %cst_68 : f32 to vector<1x128xf32>
    %284 = arith.select %280, %282, %283 : vector<1x128xi1>, vector<1x128xf32>
    %285 = arith.addf %224, %284 : vector<1x128xf32>
    %cst_69 = arith.constant 1.000000e+02 : f32
    %286 = vector.broadcast %cst_69 : f32 to vector<1x1xf32>
    %287 = arith.subf %286, %278 : vector<1x1xf32>
    %c7_i32 = arith.constant 7 : i32
    %288 = vector.broadcast %c7_i32 : i32 to vector<1x128xi32>
    %289 = arith.cmpi eq, %0, %288 : vector<1x128xi32>
    %cst_70 = arith.constant 0.000000e+00 : f32
    %290 = vector.shape_cast %287 : vector<1x1xf32> to vector<1x1xf32>
    %291 = vector.broadcast %290 : vector<1x1xf32> to vector<1x128xf32>
    %292 = vector.broadcast %cst_70 : f32 to vector<1x128xf32>
    %293 = arith.select %289, %291, %292 : vector<1x128xi1>, vector<1x128xf32>
    %294 = arith.addf %285, %293 : vector<1x128xf32>
    %c0_71 = arith.constant 0 : index
    %c0_72 = arith.constant 0 : index
    %295 = vector.load %arg0[%c0_71, %c0_72] : memref<16x5xf32, #tpu.memory_space<vmem>>, vector<16x5xf32>
    %cst_73 = arith.constant dense<0xFF800000> : vector<16xf32>
    %296 = vector.multi_reduction <maximumf>, %295, %cst_73 [1] : vector<16x5xf32> to vector<16xf32>
    %297 = vector.shape_cast %296 : vector<16xf32> to vector<16x1xf32>
    %298 = vector.extract_strided_slice %295 {offsets = [0, 4], sizes = [16, 1], strides = [1, 1]} : vector<16x5xf32> to vector<16x1xf32>
    %299 = arith.cmpf olt, %298, %297 : vector<16x1xf32>
    %300 = arith.extui %299 : vector<16x1xi1> to vector<16x1xi32>
    %301 = arith.sitofp %300 : vector<16x1xi32> to vector<16x1xf32>
    %302 = arith.mulf %301, %6 : vector<16x1xf32>
    %cst_74 = arith.constant 0.000000e+00 : f32
    %303 = vector.broadcast %cst_74 : f32 to vector<1x1xf32>
    %c0_i32_75 = arith.constant 0 : i32
    %304 = vector.broadcast %c0_i32_75 : i32 to vector<16x1xi32>
    %305 = arith.cmpi sge, %2, %304 : vector<16x1xi32>
    %c8_i32_76 = arith.constant 8 : i32
    %306 = vector.broadcast %c8_i32_76 : i32 to vector<16x1xi32>
    %307 = arith.cmpi slt, %2, %306 : vector<16x1xi32>
    %308 = arith.andi %305, %307 : vector<16x1xi1>
    %309 = arith.extui %308 : vector<16x1xi1> to vector<16x1xi32>
    %310 = arith.sitofp %309 : vector<16x1xi32> to vector<16x1xf32>
    %311 = arith.mulf %302, %310 : vector<16x1xf32>
    %312 = vector.shape_cast %311 : vector<16x1xf32> to vector<1x16x1xf32>
    %cst_77 = arith.constant dense<0.000000e+00> : vector<1xf32>
    %313 = vector.multi_reduction <add>, %312, %cst_77 [1, 2] : vector<1x16x1xf32> to vector<1xf32>
    %314 = vector.shape_cast %313 : vector<1xf32> to vector<1x1x1xf32>
    %315 = vector.extract %314[0, 0, 0] : f32 from vector<1x1x1xf32>
    %316 = vector.broadcast %315 : f32 to vector<1x1xf32>
    %cst_78 = arith.constant 3.000000e+00 : f32
    %317 = vector.broadcast %cst_78 : f32 to vector<1x1xf32>
    %318 = arith.subf %316, %317 : vector<1x1xf32>
    %319 = math.absf %318 : vector<1x1xf32>
    %320 = arith.addf %303, %319 : vector<1x1xf32>
    %c8_i32_79 = arith.constant 8 : i32
    %321 = vector.broadcast %c8_i32_79 : i32 to vector<16x1xi32>
    %322 = arith.cmpi sge, %2, %321 : vector<16x1xi32>
    %c16_i32_80 = arith.constant 16 : i32
    %323 = vector.broadcast %c16_i32_80 : i32 to vector<16x1xi32>
    %324 = arith.cmpi slt, %2, %323 : vector<16x1xi32>
    %325 = arith.andi %322, %324 : vector<16x1xi1>
    %326 = arith.extui %325 : vector<16x1xi1> to vector<16x1xi32>
    %327 = arith.sitofp %326 : vector<16x1xi32> to vector<16x1xf32>
    %328 = arith.mulf %302, %327 : vector<16x1xf32>
    %329 = vector.shape_cast %328 : vector<16x1xf32> to vector<1x16x1xf32>
    %cst_81 = arith.constant dense<0.000000e+00> : vector<1xf32>
    %330 = vector.multi_reduction <add>, %329, %cst_81 [1, 2] : vector<1x16x1xf32> to vector<1xf32>
    %331 = vector.shape_cast %330 : vector<1xf32> to vector<1x1x1xf32>
    %332 = vector.extract %331[0, 0, 0] : f32 from vector<1x1x1xf32>
    %333 = vector.broadcast %332 : f32 to vector<1x1xf32>
    %cst_82 = arith.constant 2.000000e+00 : f32
    %334 = vector.broadcast %cst_82 : f32 to vector<1x1xf32>
    %335 = arith.subf %333, %334 : vector<1x1xf32>
    %336 = math.absf %335 : vector<1x1xf32>
    %337 = arith.addf %320, %336 : vector<1x1xf32>
    %cst_83 = arith.constant 2.000000e+00 : f32
    %338 = vector.broadcast %cst_83 : f32 to vector<1x1xf32>
    %339 = arith.divf %337, %338 : vector<1x1xf32>
    %c8_i32_84 = arith.constant 8 : i32
    %340 = vector.broadcast %c8_i32_84 : i32 to vector<1x128xi32>
    %341 = arith.cmpi eq, %0, %340 : vector<1x128xi32>
    %cst_85 = arith.constant 0.000000e+00 : f32
    %342 = vector.shape_cast %339 : vector<1x1xf32> to vector<1x1xf32>
    %343 = vector.broadcast %342 : vector<1x1xf32> to vector<1x128xf32>
    %344 = vector.broadcast %cst_85 : f32 to vector<1x128xf32>
    %345 = arith.select %341, %343, %344 : vector<1x128xi1>, vector<1x128xf32>
    %346 = arith.addf %294, %345 : vector<1x128xf32>
    %c0_86 = arith.constant 0 : index
    %c0_87 = arith.constant 0 : index
    %347 = vector.load %arg6[%c0_86, %c0_87] : memref<8x16xf32, #tpu.memory_space<vmem>>, vector<8x16xf32>
    %348 = vector.extract_strided_slice %347 {offsets = [0, 12], sizes = [8, 1], strides = [1, 1]} : vector<8x16xf32> to vector<8x1xf32>
    %349 = vector.extract_strided_slice %347 {offsets = [0, 0], sizes = [8, 4], strides = [1, 1]} : vector<8x16xf32> to vector<8x4xf32>
    %350 = vector.extract_strided_slice %347 {offsets = [0, 4], sizes = [8, 4], strides = [1, 1]} : vector<8x16xf32> to vector<8x4xf32>
    %351 = arith.subf %349, %350 : vector<8x4xf32>
    %352 = math.absf %351 : vector<8x4xf32>
    %353 = vector.broadcast %348 : vector<8x1xf32> to vector<8x4xf32>
    %354 = arith.mulf %352, %353 : vector<8x4xf32>
    %355 = vector.shape_cast %354 : vector<8x4xf32> to vector<1x8x4xf32>
    %cst_88 = arith.constant dense<0.000000e+00> : vector<1xf32>
    %356 = vector.multi_reduction <add>, %355, %cst_88 [1, 2] : vector<1x8x4xf32> to vector<1xf32>
    %357 = vector.shape_cast %356 : vector<1xf32> to vector<1x1x1xf32>
    %358 = vector.extract %357[0, 0, 0] : f32 from vector<1x1x1xf32>
    %359 = vector.broadcast %358 : f32 to vector<1x1xf32>
    %360 = vector.extract_strided_slice %349 {offsets = [0, 0], sizes = [8, 1], strides = [1, 1]} : vector<8x4xf32> to vector<8x1xf32>
    %361 = vector.extract_strided_slice %349 {offsets = [0, 1], sizes = [8, 1], strides = [1, 1]} : vector<8x4xf32> to vector<8x1xf32>
    %362 = vector.extract_strided_slice %349 {offsets = [0, 2], sizes = [8, 1], strides = [1, 1]} : vector<8x4xf32> to vector<8x1xf32>
    %363 = vector.extract_strided_slice %349 {offsets = [0, 3], sizes = [8, 1], strides = [1, 1]} : vector<8x4xf32> to vector<8x1xf32>
    %cst_89 = arith.constant 5.000000e-01 : f32
    %364 = vector.broadcast %cst_89 : f32 to vector<8x1xf32>
    %365 = arith.mulf %364, %362 : vector<8x1xf32>
    %366 = arith.subf %360, %365 : vector<8x1xf32>
    %cst_90 = arith.constant 5.000000e-01 : f32
    %367 = vector.broadcast %cst_90 : f32 to vector<8x1xf32>
    %368 = arith.mulf %367, %363 : vector<8x1xf32>
    %369 = arith.subf %361, %368 : vector<8x1xf32>
    %cst_91 = arith.constant 5.000000e-01 : f32
    %370 = vector.broadcast %cst_91 : f32 to vector<8x1xf32>
    %371 = arith.mulf %370, %362 : vector<8x1xf32>
    %372 = arith.addf %360, %371 : vector<8x1xf32>
    %cst_92 = arith.constant 5.000000e-01 : f32
    %373 = vector.broadcast %cst_92 : f32 to vector<8x1xf32>
    %374 = arith.mulf %373, %363 : vector<8x1xf32>
    %375 = arith.addf %361, %374 : vector<8x1xf32>
    %376 = vector.extract_strided_slice %350 {offsets = [0, 0], sizes = [8, 1], strides = [1, 1]} : vector<8x4xf32> to vector<8x1xf32>
    %377 = vector.extract_strided_slice %350 {offsets = [0, 1], sizes = [8, 1], strides = [1, 1]} : vector<8x4xf32> to vector<8x1xf32>
    %378 = vector.extract_strided_slice %350 {offsets = [0, 2], sizes = [8, 1], strides = [1, 1]} : vector<8x4xf32> to vector<8x1xf32>
    %379 = vector.extract_strided_slice %350 {offsets = [0, 3], sizes = [8, 1], strides = [1, 1]} : vector<8x4xf32> to vector<8x1xf32>
    %cst_93 = arith.constant 5.000000e-01 : f32
    %380 = vector.broadcast %cst_93 : f32 to vector<8x1xf32>
    %381 = arith.mulf %380, %378 : vector<8x1xf32>
    %382 = arith.subf %376, %381 : vector<8x1xf32>
    %cst_94 = arith.constant 5.000000e-01 : f32
    %383 = vector.broadcast %cst_94 : f32 to vector<8x1xf32>
    %384 = arith.mulf %383, %379 : vector<8x1xf32>
    %385 = arith.subf %377, %384 : vector<8x1xf32>
    %cst_95 = arith.constant 5.000000e-01 : f32
    %386 = vector.broadcast %cst_95 : f32 to vector<8x1xf32>
    %387 = arith.mulf %386, %378 : vector<8x1xf32>
    %388 = arith.addf %376, %387 : vector<8x1xf32>
    %cst_96 = arith.constant 5.000000e-01 : f32
    %389 = vector.broadcast %cst_96 : f32 to vector<8x1xf32>
    %390 = arith.mulf %389, %379 : vector<8x1xf32>
    %391 = arith.addf %377, %390 : vector<8x1xf32>
    %392 = arith.subf %372, %366 : vector<8x1xf32>
    %393 = arith.subf %375, %369 : vector<8x1xf32>
    %394 = arith.mulf %392, %393 : vector<8x1xf32>
    %395 = arith.subf %388, %382 : vector<8x1xf32>
    %396 = arith.subf %391, %385 : vector<8x1xf32>
    %397 = arith.mulf %395, %396 : vector<8x1xf32>
    %398 = arith.maximumf %366, %382 : vector<8x1xf32>
    %399 = arith.maximumf %369, %385 : vector<8x1xf32>
    %400 = arith.minimumf %372, %388 : vector<8x1xf32>
    %401 = arith.minimumf %375, %391 : vector<8x1xf32>
    %402 = arith.subf %400, %398 : vector<8x1xf32>
    %cst_97 = arith.constant 0.000000e+00 : f32
    %403 = vector.broadcast %cst_97 : f32 to vector<8x1xf32>
    %404 = arith.maximumf %402, %403 : vector<8x1xf32>
    %405 = arith.subf %401, %399 : vector<8x1xf32>
    %cst_98 = arith.constant 0.000000e+00 : f32
    %406 = vector.broadcast %cst_98 : f32 to vector<8x1xf32>
    %407 = arith.maximumf %405, %406 : vector<8x1xf32>
    %408 = arith.mulf %404, %407 : vector<8x1xf32>
    %409 = arith.addf %394, %397 : vector<8x1xf32>
    %410 = arith.subf %409, %408 : vector<8x1xf32>
    %411 = arith.divf %408, %410 : vector<8x1xf32>
    %412 = arith.minimumf %366, %382 : vector<8x1xf32>
    %413 = arith.minimumf %369, %385 : vector<8x1xf32>
    %414 = arith.maximumf %372, %388 : vector<8x1xf32>
    %415 = arith.maximumf %375, %391 : vector<8x1xf32>
    %416 = arith.subf %414, %412 : vector<8x1xf32>
    %417 = arith.subf %415, %413 : vector<8x1xf32>
    %418 = arith.mulf %416, %417 : vector<8x1xf32>
    %419 = arith.subf %418, %410 : vector<8x1xf32>
    %420 = arith.divf %419, %418 : vector<8x1xf32>
    %421 = arith.subf %411, %420 : vector<8x1xf32>
    %cst_99 = arith.constant 2.000000e-01 : f32
    %422 = vector.broadcast %cst_99 : f32 to vector<1x1xf32>
    %423 = arith.mulf %359, %422 : vector<1x1xf32>
    %c9_i32 = arith.constant 9 : i32
    %424 = vector.broadcast %c9_i32 : i32 to vector<1x128xi32>
    %425 = arith.cmpi eq, %0, %424 : vector<1x128xi32>
    %cst_100 = arith.constant 0.000000e+00 : f32
    %426 = vector.shape_cast %423 : vector<1x1xf32> to vector<1x1xf32>
    %427 = vector.broadcast %426 : vector<1x1xf32> to vector<1x128xf32>
    %428 = vector.broadcast %cst_100 : f32 to vector<1x128xf32>
    %429 = arith.select %425, %427, %428 : vector<1x128xi1>, vector<1x128xf32>
    %430 = arith.addf %346, %429 : vector<1x128xf32>
    %cst_101 = arith.constant 1.000000e+00 : f32
    %431 = vector.broadcast %cst_101 : f32 to vector<8x1xf32>
    %432 = arith.subf %431, %421 : vector<8x1xf32>
    %433 = arith.mulf %432, %348 : vector<8x1xf32>
    %434 = vector.shape_cast %433 : vector<8x1xf32> to vector<1x8x1xf32>
    %cst_102 = arith.constant dense<0.000000e+00> : vector<1xf32>
    %435 = vector.multi_reduction <add>, %434, %cst_102 [1, 2] : vector<1x8x1xf32> to vector<1xf32>
    %436 = vector.shape_cast %435 : vector<1xf32> to vector<1x1x1xf32>
    %437 = vector.extract %436[0, 0, 0] : f32 from vector<1x1x1xf32>
    %438 = vector.broadcast %437 : f32 to vector<1x1xf32>
    %cst_103 = arith.constant 2.000000e-01 : f32
    %439 = vector.broadcast %cst_103 : f32 to vector<1x1xf32>
    %440 = arith.mulf %438, %439 : vector<1x1xf32>
    %c10_i32 = arith.constant 10 : i32
    %441 = vector.broadcast %c10_i32 : i32 to vector<1x128xi32>
    %442 = arith.cmpi eq, %0, %441 : vector<1x128xi32>
    %cst_104 = arith.constant 0.000000e+00 : f32
    %443 = vector.shape_cast %440 : vector<1x1xf32> to vector<1x1xf32>
    %444 = vector.broadcast %443 : vector<1x1xf32> to vector<1x128xf32>
    %445 = vector.broadcast %cst_104 : f32 to vector<1x128xf32>
    %446 = arith.select %442, %444, %445 : vector<1x128xi1>, vector<1x128xf32>
    %447 = arith.addf %430, %446 : vector<1x128xf32>
    %448 = vector.extract_strided_slice %347 {offsets = [0, 8], sizes = [8, 1], strides = [1, 1]} : vector<8x16xf32> to vector<8x1xf32>
    %449 = vector.extract_strided_slice %347 {offsets = [0, 9], sizes = [8, 1], strides = [1, 1]} : vector<8x16xf32> to vector<8x1xf32>
    %450 = arith.subf %448, %449 : vector<8x1xf32>
    %451 = math.absf %450 : vector<8x1xf32>
    %452 = arith.mulf %451, %348 : vector<8x1xf32>
    %453 = vector.shape_cast %452 : vector<8x1xf32> to vector<1x8x1xf32>
    %cst_105 = arith.constant dense<0.000000e+00> : vector<1xf32>
    %454 = vector.multi_reduction <add>, %453, %cst_105 [1, 2] : vector<1x8x1xf32> to vector<1xf32>
    %455 = vector.shape_cast %454 : vector<1xf32> to vector<1x1x1xf32>
    %456 = vector.extract %455[0, 0, 0] : f32 from vector<1x1x1xf32>
    %457 = vector.broadcast %456 : f32 to vector<1x1xf32>
    %cst_106 = arith.constant 2.000000e-01 : f32
    %458 = vector.broadcast %cst_106 : f32 to vector<1x1xf32>
    %459 = arith.mulf %457, %458 : vector<1x1xf32>
    %c11_i32 = arith.constant 11 : i32
    %460 = vector.broadcast %c11_i32 : i32 to vector<1x128xi32>
    %461 = arith.cmpi eq, %0, %460 : vector<1x128xi32>
    %cst_107 = arith.constant 0.000000e+00 : f32
    %462 = vector.shape_cast %459 : vector<1x1xf32> to vector<1x1xf32>
    %463 = vector.broadcast %462 : vector<1x1xf32> to vector<1x128xf32>
    %464 = vector.broadcast %cst_107 : f32 to vector<1x128xf32>
    %465 = arith.select %461, %463, %464 : vector<1x128xi1>, vector<1x128xf32>
    %466 = arith.addf %447, %465 : vector<1x128xf32>
    %467 = arith.mulf %450, %450 : vector<8x1xf32>
    %468 = arith.mulf %467, %348 : vector<8x1xf32>
    %469 = vector.shape_cast %468 : vector<8x1xf32> to vector<1x8x1xf32>
    %cst_108 = arith.constant dense<0.000000e+00> : vector<1xf32>
    %470 = vector.multi_reduction <add>, %469, %cst_108 [1, 2] : vector<1x8x1xf32> to vector<1xf32>
    %471 = vector.shape_cast %470 : vector<1xf32> to vector<1x1x1xf32>
    %472 = vector.extract %471[0, 0, 0] : f32 from vector<1x1x1xf32>
    %473 = vector.broadcast %472 : f32 to vector<1x1xf32>
    %cst_109 = arith.constant 2.000000e-01 : f32
    %474 = vector.broadcast %cst_109 : f32 to vector<1x1xf32>
    %475 = arith.mulf %473, %474 : vector<1x1xf32>
    %c12_i32 = arith.constant 12 : i32
    %476 = vector.broadcast %c12_i32 : i32 to vector<1x128xi32>
    %477 = arith.cmpi eq, %0, %476 : vector<1x128xi32>
    %cst_110 = arith.constant 0.000000e+00 : f32
    %478 = vector.shape_cast %475 : vector<1x1xf32> to vector<1x1xf32>
    %479 = vector.broadcast %478 : vector<1x1xf32> to vector<1x128xf32>
    %480 = vector.broadcast %cst_110 : f32 to vector<1x128xf32>
    %481 = arith.select %477, %479, %480 : vector<1x128xi1>, vector<1x128xf32>
    %482 = arith.addf %466, %481 : vector<1x128xf32>
    %483 = vector.extract_strided_slice %347 {offsets = [0, 10], sizes = [8, 1], strides = [1, 1]} : vector<8x16xf32> to vector<8x1xf32>
    %484 = vector.extract_strided_slice %347 {offsets = [0, 11], sizes = [8, 1], strides = [1, 1]} : vector<8x16xf32> to vector<8x1xf32>
    %485 = arith.subf %483, %484 : vector<8x1xf32>
    %486 = math.absf %485 : vector<8x1xf32>
    %487 = arith.mulf %486, %348 : vector<8x1xf32>
    %488 = vector.shape_cast %487 : vector<8x1xf32> to vector<1x8x1xf32>
    %cst_111 = arith.constant dense<0.000000e+00> : vector<1xf32>
    %489 = vector.multi_reduction <add>, %488, %cst_111 [1, 2] : vector<1x8x1xf32> to vector<1xf32>
    %490 = vector.shape_cast %489 : vector<1xf32> to vector<1x1x1xf32>
    %491 = vector.extract %490[0, 0, 0] : f32 from vector<1x1x1xf32>
    %492 = vector.broadcast %491 : f32 to vector<1x1xf32>
    %cst_112 = arith.constant 2.000000e-01 : f32
    %493 = vector.broadcast %cst_112 : f32 to vector<1x1xf32>
    %494 = arith.mulf %492, %493 : vector<1x1xf32>
    %c13_i32 = arith.constant 13 : i32
    %495 = vector.broadcast %c13_i32 : i32 to vector<1x128xi32>
    %496 = arith.cmpi eq, %0, %495 : vector<1x128xi32>
    %cst_113 = arith.constant 0.000000e+00 : f32
    %497 = vector.shape_cast %494 : vector<1x1xf32> to vector<1x1xf32>
    %498 = vector.broadcast %497 : vector<1x1xf32> to vector<1x128xf32>
    %499 = vector.broadcast %cst_113 : f32 to vector<1x128xf32>
    %500 = arith.select %496, %498, %499 : vector<1x128xi1>, vector<1x128xf32>
    %501 = arith.addf %482, %500 : vector<1x128xf32>
    %502 = arith.mulf %485, %485 : vector<8x1xf32>
    %503 = arith.mulf %502, %348 : vector<8x1xf32>
    %504 = vector.shape_cast %503 : vector<8x1xf32> to vector<1x8x1xf32>
    %cst_114 = arith.constant dense<0.000000e+00> : vector<1xf32>
    %505 = vector.multi_reduction <add>, %504, %cst_114 [1, 2] : vector<1x8x1xf32> to vector<1xf32>
    %506 = vector.shape_cast %505 : vector<1xf32> to vector<1x1x1xf32>
    %507 = vector.extract %506[0, 0, 0] : f32 from vector<1x1x1xf32>
    %508 = vector.broadcast %507 : f32 to vector<1x1xf32>
    %cst_115 = arith.constant 2.000000e-01 : f32
    %509 = vector.broadcast %cst_115 : f32 to vector<1x1xf32>
    %510 = arith.mulf %508, %509 : vector<1x1xf32>
    %c14_i32 = arith.constant 14 : i32
    %511 = vector.broadcast %c14_i32 : i32 to vector<1x128xi32>
    %512 = arith.cmpi eq, %0, %511 : vector<1x128xi32>
    %cst_116 = arith.constant 0.000000e+00 : f32
    %513 = vector.shape_cast %510 : vector<1x1xf32> to vector<1x1xf32>
    %514 = vector.broadcast %513 : vector<1x1xf32> to vector<1x128xf32>
    %515 = vector.broadcast %cst_116 : f32 to vector<1x128xf32>
    %516 = arith.select %512, %514, %515 : vector<1x128xi1>, vector<1x128xf32>
    %517 = arith.addf %501, %516 : vector<1x128xf32>
    %c0_117 = arith.constant 0 : index
    %c0_118 = arith.constant 0 : index
    %518 = vector.load %arg7[%c0_117, %c0_118] : memref<1x128xf32, #tpu.memory_space<vmem>>, vector<1x128xf32>
    tpu.vector_store %arg7[%c0_117, %c0_118], %517 {strides = array<i32>} : memref<1x128xf32, #tpu.memory_space<vmem>>, vector<1x128xf32>,
    return
  }
}

</mosaic_0001>

<llo_original>
// kernel: tpu_custom_call.1
$region0: #{tpu_custom_call.1}
  #allocation0 [shape = 'u32[]', space=smem, size = 0x4, offset = 0x4, fixed_abs, tag = 'smem constant byte address 0x4 - core index']
  #allocation1 [shape = 'u32[144,128]{1,0:T(1,128)}', space=vmem, size = 0x12000, scoped, tag = 'internal scratch']
  %s0 = inlined_call_operand.vmem [shape: f32[16,5], index: 0, kind: input, shape index: {}]
  %s1 = inlined_call_operand.vmem [shape: f32[16,3], index: 1, kind: input, shape index: {}]
  %s2 = inlined_call_operand.vmem [shape: f32[16,9], index: 2, kind: input, shape index: {}]
  %s3 = inlined_call_operand.vmem [shape: f32[16,9], index: 3, kind: input, shape index: {}]
  %s4 = inlined_call_operand.vmem [shape: s32[16,4], index: 4, kind: input, shape index: {}]
  %s5 = inlined_call_operand.vmem [shape: f32[16,1], index: 5, kind: input, shape index: {}]
  %s6 = inlined_call_operand.vmem [shape: f32[8,16], index: 6, kind: input, shape index: {}]
  %s7 = inlined_call_operand.hbm [shape: f32[1,128], index: 7, kind: output, shape index: {}]
  %s8 = sld [smem:[#allocation0]]
  $region38: #{tpu_custom_call.1} parent=0
    _
  %s10 = ssub.s32 1, %s8
  %s11 = scalar_select 0, %s10, %s8
  $region1: #{tpu_custom_call.1} parent=0
    #allocation2 [shape = 'u8[512]{0}', space=vmem, size = 0x400, scoped, tag = 'output window, operand 0, single buffered']
    #allocation3 [shape = 's32[1]{0}', space=sflag, size = 0x4, scoped, tag = 'scoped memory for tpu_custom_call.1']
    %12 = vsyncpa [#allocation3], 0
    // Predicated region
    $region2: #{tpu_custom_call.1} parent=1 // pred_check
      _
    $region3: #{tpu_custom_call.1} parent=1 // pred_check_branch
      %14 = sbr.rel (0) target = $region5
    $region4: #{tpu_custom_call.1} parent=1 // pred_region
      _
    $region5: #{tpu_custom_call.1} parent=1 // pred_fallthru
      _
    // Predicated region
    $region6: #{tpu_custom_call.1} parent=1 // pred_check
      _
    $region7: #{tpu_custom_call.1} parent=1 // pred_check_branch
      %16 = sbr.rel (0) target = $region9
    $region8: #{tpu_custom_call.1} parent=1 // pred_region
      _
    $region9: #{tpu_custom_call.1} parent=1 // pred_fallthru
      _
    // Predicated region
    $region10: #{tpu_custom_call.1} parent=1 // pred_check
      _
    $region11: #{tpu_custom_call.1} parent=1 // pred_check_branch
      %18 = sbr.rel (0) target = $region13
    $region12: #{tpu_custom_call.1} parent=1 // pred_region
      _
    $region13: #{tpu_custom_call.1} parent=1 // pred_fallthru
      _
    // Predicated region
    $region14: #{tpu_custom_call.1} parent=1 // pred_check
      _
    $region15: #{tpu_custom_call.1} parent=1 // pred_check_branch
      %20 = sbr.rel (0) target = $region17
    $region16: #{tpu_custom_call.1} parent=1 // pred_region
      _
    $region17: #{tpu_custom_call.1} parent=1 // pred_fallthru
      _
    // Predicated region
    $region18: #{tpu_custom_call.1} parent=1 // pred_check
      _
    $region19: #{tpu_custom_call.1} parent=1 // pred_check_branch
      %22 = sbr.rel (0) target = $region21
    $region20: #{tpu_custom_call.1} parent=1 // pred_region
      _
    $region21: #{tpu_custom_call.1} parent=1 // pred_fallthru
      _
    // Predicated region
    $region22: #{tpu_custom_call.1} parent=1 // pred_check
      _
    $region23: #{tpu_custom_call.1} parent=1 // pred_check_branch
      %24 = sbr.rel (0) target = $region25
    $region24: #{tpu_custom_call.1} parent=1 // pred_region
      _
    $region25: #{tpu_custom_call.1} parent=1 // pred_fallthru
      _
    // Predicated region
    $region26: #{tpu_custom_call.1} parent=1 // pred_check
      _
    $region27: #{tpu_custom_call.1} parent=1 // pred_check_branch
      %26 = sbr.rel (0) target = $region29
    $region28: #{tpu_custom_call.1} parent=1 // pred_region
      _
    $region29: #{tpu_custom_call.1} parent=1 // pred_fallthru
      _
    %v27 = vlaneseq
    %v28 = vand.u32 %v27, 127
    %v29 = vlaneseq
    %v30 = vshrl.u32 %v29, 7
    %v31 = vadd.s32 %v30, 8
    %vm32 = vcmp.lt.s32.totalorder %v30, 16
    %vm33 = vcmp.lt.s32.totalorder %v31, 16
    %v34 = vsel %vm32, 1, 0
    %v35 = vsel %vm33, 1, 0
    %v36 = vcvt.s32.f32 %v34
    %v37 = vcvt.s32.f32 %v35
    %v38 = vld [vmem:[%s4] sm:$0xff]
    %v39 = vld [vmem:[%s4 + $0x8] sm:$0xff]
    %v40 = vld [vmem:[%s5] sm:$0xff]
    %v41 = vld [vmem:[%s5 + $0x8] sm:$0xff]
    %v42 = vmul.f32 %v40, %v36
    %v43 = vmul.f32 %v41, %v37
    %vm44 = vcmask 7168
    %v45 = vsel %vm44, %v42, 0.0
    %v46 = vsel %vm44, %v43, 0.0
    %v47 = vadd.f32 %v45, %v46
    %48 = vadd.xlane.f32.xlu0 %v47
    %v49 = vpop.xlane.xlu0 %48
    %v50 = vrot.slane %v49, 4
    %v51 = vadd.f32 %v49, %v50
    %v52 = vrot.slane %v51, 2
    %v53 = vadd.f32 %v51, %v52
    %v54 = vrot.slane %v53, 1
    %v55 = vadd.f32 %v53, %v54
    %s56 = vtos %v55
    %v57 = vstv %s56
    %v58 = vld [vmem:[%s0] sm:$0xff]
    %v59 = vld [vmem:[%s0 + $0x8] sm:$0xff]
    %60 = vset.pattern.permute.xlu0 0
    %61 = vperm.xlu0 %60, %v38
    %v62 = vpop.permute.xlu0 %61
    %63 = vset.pattern.permute.xlu0 0
    %64 = vperm.xlu0 %63, %v39
    %v65 = vpop.permute.xlu0 %64
    %vm66 = vcmp.eq.s32.totalorder %v28, %v62
    %vm67 = vcmp.eq.s32.totalorder %v28, %v65
    %v68 = vsel %vm66, 1, 0
    %v69 = vsel %vm67, 1, 0
    %v70 = vcvt.s32.f32 %v68
    %v71 = vcvt.s32.f32 %v69
    %vm72 = vcmask 39936
    %v73 = vsel %vm72, %v58, -inf
    %74 = vmax.xlane.f32.xlu0 %v73
    %v75 = vpop.xlane.xlu0 %74
    %v76 = vsel %vm72, %v59, -inf
    %77 = vmax.xlane.f32.xlu0 %v76
    %v78 = vpop.xlane.xlu0 %77
    %v79 = vsub.f32 %v58, %v75
    %v80 = vsub.f32 %v59, %v78
    %v81 = vmul.f32 %v79, 1.442695
    %v82 = vpow.pop %v81
    %v83 = vmul.f32 %v80, 1.442695
    %v84 = vpow.pop %v83
    %v85 = vsel %vm72, %v82, 0.0
    %86 = vadd.xlane.f32.xlu0 %v85
    %v87 = vpop.xlane.xlu0 %86
    %v88 = vsel %vm72, %v84, 0.0
    %89 = vadd.xlane.f32.xlu0 %v88
    %v90 = vpop.xlane.xlu0 %89
    %v91 = vlog2.pop %v87
    %v92 = vmul.f32 %v91, 0.6931472
    %v93 = vlog2.pop %v90
    %v94 = vmul.f32 %v93, 0.6931472
    %v95 = vadd.f32 %v92, %v75
    %v96 = vadd.f32 %v94, %v78
    %v97 = vmul.f32 %v70, %v58
    %v98 = vmul.f32 %v71, %v59
    %v99 = vsel %vm72, %v97, 0.0
    %100 = vadd.xlane.f32.xlu0 %v99
    %v101 = vpop.xlane.xlu0 %100
    %v102 = vsel %vm72, %v98, 0.0
    %103 = vadd.xlane.f32.xlu0 %v102
    %v104 = vpop.xlane.xlu0 %103
    %vm105 = vcmp.eq.s32.totalorder %v38, 4
    %vm106 = vcmp.eq.s32.totalorder %v39, 4
    %v107 = vsel %vm105, 0.1, 1.0
    %v108 = vsel %vm106, 0.1, 1.0
    %v109 = vmul.f32 %v107, %v36
    %v110 = vmul.f32 %v108, %v37
    %v111 = vsub.f32 %v95, %v101
    %v112 = vsub.f32 %v96, %v104
    %v113 = vmul.f32 %v109, %v111
    %v114 = vmul.f32 %v110, %v112
    %v115 = vsel %vm44, %v113, 0.0
    %v116 = vsel %vm44, %v114, 0.0
    %v117 = vadd.f32 %v115, %v116
    %118 = vadd.xlane.f32.xlu0 %v117
    %v119 = vpop.xlane.xlu0 %118
    %v120 = vrot.slane %v119, 4
    %v121 = vadd.f32 %v119, %v120
    %v122 = vrot.slane %v121, 2
    %v123 = vadd.f32 %v121, %v122
    %v124 = vrot.slane %v123, 1
    %v125 = vadd.f32 %v123, %v124
    %s126 = vtos %v125
    %v127 = vstv %s126
    %v128 = vsel %vm44, %v109, 0.0
    %v129 = vsel %vm44, %v110, 0.0
    %v130 = vadd.f32 %v128, %v129
    %131 = vadd.xlane.f32.xlu0 %v130
    %v132 = vpop.xlane.xlu0 %131
    %v133 = vrot.slane %v132, 4
    %v134 = vadd.f32 %v132, %v133
    %v135 = vrot.slane %v134, 2
    %v136 = vadd.f32 %v134, %v135
    %v137 = vrot.slane %v136, 1
    %v138 = vadd.f32 %v136, %v137
    %s139 = vtos %v138
    %v140 = vstv %s139
    %v141 = vrcp.pop %v140
    %v142 = vmul.f32 %v127, %v141
    %vm143 = vcmp.ge.f32.partialorder %v101, %v75
    %vm144 = vcmp.ge.f32.partialorder %v104, %v78
    %v145 = vsel %vm143, 1, 0
    %v146 = vsel %vm144, 1, 0
    %v147 = vcvt.s32.f32 %v145
    %v148 = vcvt.s32.f32 %v146
    %v149 = vmul.f32 %v42, %v147
    %v150 = vmul.f32 %v43, %v148
    %v151 = vsel %vm44, %v149, 0.0
    %v152 = vsel %vm44, %v150, 0.0
    %v153 = vadd.f32 %v151, %v152
    %154 = vadd.xlane.f32.xlu0 %v153
    %v155 = vpop.xlane.xlu0 %154
    %v156 = vrot.slane %v155, 4
    %v157 = vadd.f32 %v155, %v156
    %v158 = vrot.slane %v157, 2
    %v159 = vadd.f32 %v157, %v158
    %v160 = vrot.slane %v159, 1
    %v161 = vadd.f32 %v159, %v160
    %s162 = vtos %v161
    %v163 = vstv %s162
    %vm164 = vcmp.gt.f32.partialorder %v57, 0.0
    %v165 = vmul.f32 %v163, 100.0
    %v166 = vrcp.pop %v57
    %v167 = vmul.f32 %v165, %v166
    %v168 = vsel %vm164, %v167, 0.0
    %vm169 = vcmp.eq.s32.totalorder %v28, 0
    %v170 = vsel %vm169, %v142, 0.0
    %v171 = vadd.f32 %v170, 0.0
    %v172 = vsub.f32 100.0, %v168
    %vm173 = vcmp.eq.s32.totalorder %v28, 1
    %v174 = vsel %vm173, %v172, 0.0
    %v175 = vadd.f32 %v171, %v174
    %v176 = vld [vmem:[%s1] sm:$0xff]
    %v177 = vld [vmem:[%s1 + $0x8] sm:$0xff]
    %178 = vset.pattern.permute.xlu0 1
    %179 = vperm.xlu0 %178, %v38
    %v180 = vpop.permute.xlu0 %179
    %181 = vset.pattern.permute.xlu0 1
    %182 = vperm.xlu0 %181, %v39
    %v183 = vpop.permute.xlu0 %182
    %vm184 = vcmp.eq.s32.totalorder %v28, %v180
    %vm185 = vcmp.eq.s32.totalorder %v28, %v183
    %v186 = vsel %vm184, 1, 0
    %v187 = vsel %vm185, 1, 0
    %v188 = vcvt.s32.f32 %v186
    %v189 = vcvt.s32.f32 %v187
    %vm190 = vcmask 23552
    %v191 = vsel %vm190, %v176, -inf
    %192 = vmax.xlane.f32.xlu0 %v191
    %v193 = vpop.xlane.xlu0 %192
    %v194 = vsel %vm190, %v177, -inf
    %195 = vmax.xlane.f32.xlu0 %v194
    %v196 = vpop.xlane.xlu0 %195
    %v197 = vsub.f32 %v176, %v193
    %v198 = vsub.f32 %v177, %v196
    %v199 = vmul.f32 %v197, 1.442695
    %v200 = vpow.pop %v199
    %v201 = vmul.f32 %v198, 1.442695
    %v202 = vpow.pop %v201
    %v203 = vsel %vm190, %v200, 0.0
    %204 = vadd.xlane.f32.xlu0 %v203
    %v205 = vpop.xlane.xlu0 %204
    %v206 = vsel %vm190, %v202, 0.0
    %207 = vadd.xlane.f32.xlu0 %v206
    %v208 = vpop.xlane.xlu0 %207
    %v209 = vlog2.pop %v205
    %v210 = vmul.f32 %v209, 0.6931472
    %v211 = vlog2.pop %v208
    %v212 = vmul.f32 %v211, 0.6931472
    %v213 = vadd.f32 %v210, %v193
    %v214 = vadd.f32 %v212, %v196
    %v215 = vmul.f32 %v188, %v176
    %v216 = vmul.f32 %v189, %v177
    %v217 = vsel %vm190, %v215, 0.0
    %218 = vadd.xlane.f32.xlu0 %v217
    %v219 = vpop.xlane.xlu0 %218
    %v220 = vsel %vm190, %v216, 0.0
    %221 = vadd.xlane.f32.xlu0 %v220
    %v222 = vpop.xlane.xlu0 %221
    %vm223 = vcmp.eq.s32.totalorder %v38, 2
    %vm224 = vcmp.eq.s32.totalorder %v39, 2
    %v225 = vsel %vm223, 0.1, 1.0
    %v226 = vsel %vm224, 0.1, 1.0
    %v227 = vmul.f32 %v225, %v36
    %v228 = vmul.f32 %v226, %v37
    %v229 = vsub.f32 %v213, %v219
    %v230 = vsub.f32 %v214, %v222
    %v231 = vmul.f32 %v227, %v229
    %v232 = vmul.f32 %v228, %v230
    %235 = vrot.lane.b32.xlu0 %v231, 127
    %v236 = vpop.permute.xlu0 %235
    %237 = vrot.lane.b32.xlu0 %v232, 127
    %v238 = vpop.permute.xlu0 %237
    %v241 = vsel %vm44, %v236, 0.0
    %v242 = vsel %vm44, %v238, 0.0
    %v243 = vadd.f32 %v241, %v242
    %244 = vadd.xlane.f32.xlu0 %v243
    %v245 = vpop.xlane.xlu0 %244
    %v246 = vrot.slane %v245, 4
    %v247 = vadd.f32 %v245, %v246
    %v248 = vrot.slane %v247, 2
    %v249 = vadd.f32 %v247, %v248
    %v250 = vrot.slane %v249, 1
    %v251 = vadd.f32 %v249, %v250
    %s252 = vtos %v251
    %v253 = vstv %s252
    %256 = vrot.lane.b32.xlu0 %v227, 127
    %v257 = vpop.permute.xlu0 %256
    %258 = vrot.lane.b32.xlu0 %v228, 127
    %v259 = vpop.permute.xlu0 %258
    %v262 = vsel %vm44, %v257, 0.0
    %v263 = vsel %vm44, %v259, 0.0
    %v264 = vadd.f32 %v262, %v263
    %265 = vadd.xlane.f32.xlu0 %v264
    %v266 = vpop.xlane.xlu0 %265
    %v267 = vrot.slane %v266, 4
    %v268 = vadd.f32 %v266, %v267
    %v269 = vrot.slane %v268, 2
    %v270 = vadd.f32 %v268, %v269
    %v271 = vrot.slane %v270, 1
    %v272 = vadd.f32 %v270, %v271
    %s273 = vtos %v272
    %v274 = vstv %s273
    %v275 = vrcp.pop %v274
    %v276 = vmul.f32 %v253, %v275
    %vm277 = vcmp.ge.f32.partialorder %v219, %v193
    %vm278 = vcmp.ge.f32.partialorder %v222, %v196
    %v279 = vsel %vm277, 1, 0
    %v280 = vsel %vm278, 1, 0
    %v281 = vcvt.s32.f32 %v279
    %v282 = vcvt.s32.f32 %v280
    %v283 = vmul.f32 %v42, %v281
    %v284 = vmul.f32 %v43, %v282
    %v285 = vsel %vm44, %v283, 0.0
    %v286 = vsel %vm44, %v284, 0.0
    %v287 = vadd.f32 %v285, %v286
    %288 = vadd.xlane.f32.xlu0 %v287
    %v289 = vpop.xlane.xlu0 %288
    %v290 = vrot.slane %v289, 4
    %v291 = vadd.f32 %v289, %v290
    %v292 = vrot.slane %v291, 2
    %v293 = vadd.f32 %v291, %v292
    %v294 = vrot.slane %v293, 1
    %v295 = vadd.f32 %v293, %v294
    %s296 = vtos %v295
    %v297 = vstv %s296
    %v298 = vmul.f32 %v297, 100.0
    %v299 = vmul.f32 %v298, %v166
    %v300 = vsel %vm164, %v299, 0.0
    %vm301 = vcmp.eq.s32.totalorder %v28, 2
    %v302 = vsel %vm301, %v276, 0.0
    %v303 = vadd.f32 %v175, %v302
    %v304 = vsub.f32 100.0, %v300
    %vm305 = vcmp.eq.s32.totalorder %v28, 3
    %v306 = vsel %vm305, %v304, 0.0
    %v307 = vadd.f32 %v303, %v306
    %v308 = vld [vmem:[%s2] sm:$0xff]
    %v309 = vld [vmem:[%s2 + $0x8] sm:$0xff]
    %310 = vset.pattern.permute.xlu0 2
    %311 = vperm.xlu0 %310, %v38
    %v312 = vpop.permute.xlu0 %311
    %313 = vset.pattern.permute.xlu0 2
    %314 = vperm.xlu0 %313, %v39
    %v315 = vpop.permute.xlu0 %314
    %vm316 = vcmp.eq.s32.totalorder %v28, %v312
    %vm317 = vcmp.eq.s32.totalorder %v28, %v315
    %v318 = vsel %vm316, 1, 0
    %v319 = vsel %vm317, 1, 0
    %v320 = vcvt.s32.f32 %v318
    %v321 = vcvt.s32.f32 %v319
    %vm322 = vcmask 72704
    %v323 = vsel %vm322, %v308, -inf
    %324 = vmax.xlane.f32.xlu0 %v323
    %v325 = vpop.xlane.xlu0 %324
    %v326 = vsel %vm322, %v309, -inf
    %327 = vmax.xlane.f32.xlu0 %v326
    %v328 = vpop.xlane.xlu0 %327
    %v329 = vsub.f32 %v308, %v325
    %v330 = vsub.f32 %v309, %v328
    %v331 = vmul.f32 %v329, 1.442695
    %v332 = vpow.pop %v331
    %v333 = vmul.f32 %v330, 1.442695
    %v334 = vpow.pop %v333
    %v335 = vsel %vm322, %v332, 0.0
    %336 = vadd.xlane.f32.xlu0 %v335
    %v337 = vpop.xlane.xlu0 %336
    %v338 = vsel %vm322, %v334, 0.0
    %339 = vadd.xlane.f32.xlu0 %v338
    %v340 = vpop.xlane.xlu0 %339
    %v341 = vlog2.pop %v337
    %v342 = vmul.f32 %v341, 0.6931472
    %v343 = vlog2.pop %v340
    %v344 = vmul.f32 %v343, 0.6931472
    %v345 = vadd.f32 %v342, %v325
    %v346 = vadd.f32 %v344, %v328
    %v347 = vmul.f32 %v320, %v308
    %v348 = vmul.f32 %v321, %v309
    %v349 = vsel %vm322, %v347, 0.0
    %350 = vadd.xlane.f32.xlu0 %v349
    %v351 = vpop.xlane.xlu0 %350
    %v352 = vsel %vm322, %v348, 0.0
    %353 = vadd.xlane.f32.xlu0 %v352
    %v354 = vpop.xlane.xlu0 %353
    %vm355 = vcmp.eq.s32.totalorder %v38, 8
    %vm356 = vcmp.eq.s32.totalorder %v39, 8
    %v357 = vsel %vm355, 0.1, 1.0
    %v358 = vsel %vm356, 0.1, 1.0
    %v359 = vmul.f32 %v357, %v36
    %v360 = vmul.f32 %v358, %v37
    %v361 = vsub.f32 %v345, %v351
    %v362 = vsub.f32 %v346, %v354
    %v363 = vmul.f32 %v359, %v361
    %v364 = vmul.f32 %v360, %v362
    %367 = vrot.lane.b32.xlu0 %v363, 126
    %v368 = vpop.permute.xlu0 %367
    %369 = vrot.lane.b32.xlu0 %v364, 126
    %v370 = vpop.permute.xlu0 %369
    %v373 = vsel %vm44, %v368, 0.0
    %v374 = vsel %vm44, %v370, 0.0
    %v375 = vadd.f32 %v373, %v374
    %376 = vadd.xlane.f32.xlu0 %v375
    %v377 = vpop.xlane.xlu0 %376
    %v378 = vrot.slane %v377, 4
    %v379 = vadd.f32 %v377, %v378
    %v380 = vrot.slane %v379, 2
    %v381 = vadd.f32 %v379, %v380
    %v382 = vrot.slane %v381, 1
    %v383 = vadd.f32 %v381, %v382
    %s384 = vtos %v383
    %v385 = vstv %s384
    %388 = vrot.lane.b32.xlu0 %v359, 126
    %v389 = vpop.permute.xlu0 %388
    %390 = vrot.lane.b32.xlu0 %v360, 126
    %v391 = vpop.permute.xlu0 %390
    %v394 = vsel %vm44, %v389, 0.0
    %v395 = vsel %vm44, %v391, 0.0
    %v396 = vadd.f32 %v394, %v395
    %397 = vadd.xlane.f32.xlu0 %v396
    %v398 = vpop.xlane.xlu0 %397
    %v399 = vrot.slane %v398, 4
    %v400 = vadd.f32 %v398, %v399
    %v401 = vrot.slane %v400, 2
    %v402 = vadd.f32 %v400, %v401
    %v403 = vrot.slane %v402, 1
    %v404 = vadd.f32 %v402, %v403
    %s405 = vtos %v404
    %v406 = vstv %s405
    %v407 = vrcp.pop %v406
    %v408 = vmul.f32 %v385, %v407
    %vm409 = vcmp.ge.f32.partialorder %v351, %v325
    %vm410 = vcmp.ge.f32.partialorder %v354, %v328
    %v411 = vsel %vm409, 1, 0
    %v412 = vsel %vm410, 1, 0
    %v413 = vcvt.s32.f32 %v411
    %v414 = vcvt.s32.f32 %v412
    %v415 = vmul.f32 %v42, %v413
    %v416 = vmul.f32 %v43, %v414
    %v417 = vsel %vm44, %v415, 0.0
    %v418 = vsel %vm44, %v416, 0.0
    %v419 = vadd.f32 %v417, %v418
    %420 = vadd.xlane.f32.xlu0 %v419
    %v421 = vpop.xlane.xlu0 %420
    %v422 = vrot.slane %v421, 4
    %v423 = vadd.f32 %v421, %v422
    %v424 = vrot.slane %v423, 2
    %v425 = vadd.f32 %v423, %v424
    %v426 = vrot.slane %v425, 1
    %v427 = vadd.f32 %v425, %v426
    %s428 = vtos %v427
    %v429 = vstv %s428
    %v430 = vmul.f32 %v429, 100.0
    %v431 = vmul.f32 %v430, %v166
    %v432 = vsel %vm164, %v431, 0.0
    %vm433 = vcmp.eq.s32.totalorder %v28, 4
    %v434 = vsel %vm433, %v408, 0.0
    %v435 = vadd.f32 %v307, %v434
    %v436 = vsub.f32 100.0, %v432
    %vm437 = vcmp.eq.s32.totalorder %v28, 5
    %v438 = vsel %vm437, %v436, 0.0
    %v439 = vadd.f32 %v435, %v438
    %v440 = vld [vmem:[%s3] sm:$0xff]
    %v441 = vld [vmem:[%s3 + $0x8] sm:$0xff]
    %442 = vset.pattern.permute.xlu0 3
    %443 = vperm.xlu0 %442, %v38
    %v444 = vpop.permute.xlu0 %443
    %445 = vset.pattern.permute.xlu0 3
    %446 = vperm.xlu0 %445, %v39
    %v447 = vpop.permute.xlu0 %446
    %vm448 = vcmp.eq.s32.totalorder %v28, %v444
    %vm449 = vcmp.eq.s32.totalorder %v28, %v447
    %v450 = vsel %vm448, 1, 0
    %v451 = vsel %vm449, 1, 0
    %v452 = vcvt.s32.f32 %v450
    %v453 = vcvt.s32.f32 %v451
    %v454 = vsel %vm322, %v440, -inf
    %455 = vmax.xlane.f32.xlu0 %v454
    %v456 = vpop.xlane.xlu0 %455
    %v457 = vsel %vm322, %v441, -inf
    %458 = vmax.xlane.f32.xlu0 %v457
    %v459 = vpop.xlane.xlu0 %458
    %v460 = vsub.f32 %v440, %v456
    %v461 = vsub.f32 %v441, %v459
    %v462 = vmul.f32 %v460, 1.442695
    %v463 = vpow.pop %v462
    %v464 = vmul.f32 %v461, 1.442695
    %v465 = vpow.pop %v464
    %v466 = vsel %vm322, %v463, 0.0
    %467 = vadd.xlane.f32.xlu0 %v466
    %v468 = vpop.xlane.xlu0 %467
    %v469 = vsel %vm322, %v465, 0.0
    %470 = vadd.xlane.f32.xlu0 %v469
    %v471 = vpop.xlane.xlu0 %470
    %v472 = vlog2.pop %v468
    %v473 = vmul.f32 %v472, 0.6931472
    %v474 = vlog2.pop %v471
    %v475 = vmul.f32 %v474, 0.6931472
    %v476 = vadd.f32 %v473, %v456
    %v477 = vadd.f32 %v475, %v459
    %v478 = vmul.f32 %v452, %v440
    %v479 = vmul.f32 %v453, %v441
    %v480 = vsel %vm322, %v478, 0.0
    %481 = vadd.xlane.f32.xlu0 %v480
    %v482 = vpop.xlane.xlu0 %481
    %v483 = vsel %vm322, %v479, 0.0
    %484 = vadd.xlane.f32.xlu0 %v483
    %v485 = vpop.xlane.xlu0 %484
    %v486 = vsub.f32 %v476, %v482
    %v487 = vsub.f32 %v477, %v485
    %v488 = vmul.f32 %v359, %v486
    %v489 = vmul.f32 %v360, %v487
    %492 = vrot.lane.b32.xlu0 %v488, 125
    %v493 = vpop.permute.xlu0 %492
    %494 = vrot.lane.b32.xlu0 %v489, 125
    %v495 = vpop.permute.xlu0 %494
    %v498 = vsel %vm44, %v493, 0.0
    %v499 = vsel %vm44, %v495, 0.0
    %v500 = vadd.f32 %v498, %v499
    %501 = vadd.xlane.f32.xlu0 %v500
    %v502 = vpop.xlane.xlu0 %501
    %v503 = vrot.slane %v502, 4
    %v504 = vadd.f32 %v502, %v503
    %v505 = vrot.slane %v504, 2
    %v506 = vadd.f32 %v504, %v505
    %v507 = vrot.slane %v506, 1
    %v508 = vadd.f32 %v506, %v507
    %s509 = vtos %v508
    %v510 = vstv %s509
    %511 = vrot.lane.b32.xlu0 %v359, 125
    %v512 = vpop.permute.xlu0 %511
    %513 = vrot.lane.b32.xlu0 %v360, 125
    %v514 = vpop.permute.xlu0 %513
    %v517 = vsel %vm44, %v512, 0.0
    %v518 = vsel %vm44, %v514, 0.0
    %v519 = vadd.f32 %v517, %v518
    %520 = vadd.xlane.f32.xlu0 %v519
    %v521 = vpop.xlane.xlu0 %520
    %v522 = vrot.slane %v521, 4
    %v523 = vadd.f32 %v521, %v522
    %v524 = vrot.slane %v523, 2
    %v525 = vadd.f32 %v523, %v524
    %v526 = vrot.slane %v525, 1
    %v527 = vadd.f32 %v525, %v526
    %s528 = vtos %v527
    %v529 = vstv %s528
    %v530 = vrcp.pop %v529
    %v531 = vmul.f32 %v510, %v530
    %vm532 = vcmp.ge.f32.partialorder %v482, %v456
    %vm533 = vcmp.ge.f32.partialorder %v485, %v459
    %v534 = vsel %vm532, 1, 0
    %v535 = vsel %vm533, 1, 0
    %v536 = vcvt.s32.f32 %v534
    %v537 = vcvt.s32.f32 %v535
    %v538 = vmul.f32 %v42, %v536
    %v539 = vmul.f32 %v43, %v537
    %v540 = vsel %vm44, %v538, 0.0
    %v541 = vsel %vm44, %v539, 0.0
    %v542 = vadd.f32 %v540, %v541
    %543 = vadd.xlane.f32.xlu0 %v542
    %v544 = vpop.xlane.xlu0 %543
    %v545 = vrot.slane %v544, 4
    %v546 = vadd.f32 %v544, %v545
    %v547 = vrot.slane %v546, 2
    %v548 = vadd.f32 %v546, %v547
    %v549 = vrot.slane %v548, 1
    %v550 = vadd.f32 %v548, %v549
    %s551 = vtos %v550
    %v552 = vstv %s551
    %v553 = vmul.f32 %v552, 100.0
    %v554 = vmul.f32 %v553, %v166
    %v555 = vsel %vm164, %v554, 0.0
    %vm556 = vcmp.eq.s32.totalorder %v28, 6
    %v557 = vsel %vm556, %v531, 0.0
    %v558 = vadd.f32 %v439, %v557
    %v559 = vsub.f32 100.0, %v555
    %vm560 = vcmp.eq.s32.totalorder %v28, 7
    %v561 = vsel %vm560, %v559, 0.0
    %v562 = vadd.f32 %v558, %v561
    %vm563 = vcmp.lt.f32.partialorder %v58, %v75
    %vm564 = vcmp.lt.f32.partialorder %v59, %v78
    %v565 = vsel %vm563, 1, 0
    %v566 = vsel %vm564, 1, 0
    %v567 = vcvt.s32.f32 %v565
    %v568 = vcvt.s32.f32 %v566
    %v569 = vmul.f32 %v567, %v36
    %v570 = vmul.f32 %v568, %v37
    %vm571 = vcmp.ge.s32.totalorder %v30, 0
    %vm572 = vcmp.ge.s32.totalorder %v31, 0
    %vm573 = vcmp.lt.s32.totalorder %v30, 8
    %vm574 = vcmp.lt.s32.totalorder %v31, 8
    %vm575 = vmand %vm571, %vm573
    %vm576 = vmand %vm572, %vm574
    %v577 = vsel %vm575, 1, 0
    %v578 = vsel %vm576, 1, 0
    %v579 = vcvt.s32.f32 %v577
    %v580 = vcvt.s32.f32 %v578
    %v581 = vmul.f32 %v569, %v579
    %v582 = vmul.f32 %v570, %v580
    %585 = vrot.lane.b32.xlu0 %v581, 124
    %v586 = vpop.permute.xlu0 %585
    %587 = vrot.lane.b32.xlu0 %v582, 124
    %v588 = vpop.permute.xlu0 %587
    %v591 = vsel %vm44, %v586, 0.0
    %v592 = vsel %vm44, %v588, 0.0
    %v593 = vadd.f32 %v591, %v592
    %594 = vadd.xlane.f32.xlu0 %v593
    %v595 = vpop.xlane.xlu0 %594
    %v596 = vrot.slane %v595, 4
    %v597 = vadd.f32 %v595, %v596
    %v598 = vrot.slane %v597, 2
    %v599 = vadd.f32 %v597, %v598
    %v600 = vrot.slane %v599, 1
    %v601 = vadd.f32 %v599, %v600
    %s602 = vtos %v601
    %v603 = vstv %s602
    %v604 = vsub.f32 %v603, 3.0
    %v605 = vand.u32 2147483647, %v604
    %v606 = vadd.f32 %v605, 0.0
    %vm607 = vcmp.ge.s32.totalorder %v30, 8
    %vm608 = vcmp.ge.s32.totalorder %v31, 8
    %vm609 = vmand %vm607, %vm32
    %vm610 = vmand %vm608, %vm33
    %v611 = vsel %vm609, 1, 0
    %v612 = vsel %vm610, 1, 0
    %v613 = vcvt.s32.f32 %v611
    %v614 = vcvt.s32.f32 %v612
    %v615 = vmul.f32 %v569, %v613
    %v616 = vmul.f32 %v570, %v614
    %619 = vrot.lane.b32.xlu0 %v615, 124
    %v620 = vpop.permute.xlu0 %619
    %621 = vrot.lane.b32.xlu0 %v616, 124
    %v622 = vpop.permute.xlu0 %621
    %v625 = vsel %vm44, %v620, 0.0
    %v626 = vsel %vm44, %v622, 0.0
    %v627 = vadd.f32 %v625, %v626
    %628 = vadd.xlane.f32.xlu0 %v627
    %v629 = vpop.xlane.xlu0 %628
    %v630 = vrot.slane %v629, 4
    %v631 = vadd.f32 %v629, %v630
    %v632 = vrot.slane %v631, 2
    %v633 = vadd.f32 %v631, %v632
    %v634 = vrot.slane %v633, 1
    %v635 = vadd.f32 %v633, %v634
    %s636 = vtos %v635
    %v637 = vstv %s636
    %v638 = vsub.f32 %v637, 2.0
    %v639 = vand.u32 2147483647, %v638
    %v640 = vadd.f32 %v606, %v639
    %v641 = vrcp.pop 2.0
    %v642 = vmul.f32 %v640, %v641
    %vm643 = vcmp.eq.s32.totalorder %v28, 8
    %v644 = vsel %vm643, %v642, 0.0
    %v645 = vadd.f32 %v562, %v644
    %v646 = vld [vmem:[%s6] sm:$0xff]
    %648 = vrot.lane.b32.xlu0 %v646, 124
    %v649 = vpop.permute.xlu0 %648
    %v651 = vsub.f32 %v646, %v649
    %v652 = vand.u32 2147483647, %v651
    %653 = vset.pattern.permute.xlu0 12
    %654 = vperm.xlu0 %653, %v646
    %v655 = vpop.permute.xlu0 %654
    %v657 = vmul.f32 %v652, %v655
    %vm658 = vcmask 31744
    %v659 = vsel %vm658, %v657, 0.0
    %660 = vadd.xlane.f32.xlu0 %v659
    %v661 = vpop.xlane.xlu0 %660
    %v662 = vrot.slane %v661, 4
    %v663 = vadd.f32 %v661, %v662
    %v664 = vrot.slane %v663, 2
    %v665 = vadd.f32 %v663, %v664
    %v666 = vrot.slane %v665, 1
    %v667 = vadd.f32 %v665, %v666
    %s668 = vtos %v667
    %v669 = vstv %s668
    %v670 = vmul.f32 %v646, 0.5
    %672 = vrot.lane.b32.xlu0 %v670, 126
    %v673 = vpop.permute.xlu0 %672
    %v675 = vsub.f32 %v646, %v673
    %v676 = vadd.f32 %v646, %v673
    %v677 = vsub.f32 %v676, %v675
    %679 = vrot.lane.b32.xlu0 %v677, 127
    %v680 = vpop.permute.xlu0 %679
    %v682 = vmul.f32 %v677, %v680
    %684 = vrot.lane.b32.xlu0 %v675, 124
    %v685 = vpop.permute.xlu0 %684
    %v687 = vmax.f32 %v675, %v685
    %689 = vrot.lane.b32.xlu0 %v676, 124
    %v690 = vpop.permute.xlu0 %689
    %v692 = vmin.f32 %v676, %v690
    %v693 = vsub.f32 %v692, %v687
    %v694 = vmax.f32 %v693, 0.0
    %696 = vrot.lane.b32.xlu0 %v694, 127
    %v697 = vpop.permute.xlu0 %696
    %v699 = vmul.f32 %v694, %v697
    %701 = vrot.lane.b32.xlu0 %v682, 124
    %v702 = vpop.permute.xlu0 %701
    %v704 = vadd.f32 %v682, %v702
    %v705 = vsub.f32 %v704, %v699
    %v706 = vrcp.pop %v705
    %v707 = vmul.f32 %v699, %v706
    %v708 = vmin.f32 %v675, %v685
    %v709 = vmax.f32 %v676, %v690
    %v710 = vsub.f32 %v709, %v708
    %712 = vrot.lane.b32.xlu0 %v710, 127
    %v713 = vpop.permute.xlu0 %712
    %v715 = vmul.f32 %v710, %v713
    %v716 = vsub.f32 %v715, %v705
    %v717 = vrcp.pop %v715
    %v718 = vmul.f32 %v716, %v717
    %v719 = vsub.f32 %v707, %v718
    %v720 = vmul.f32 %v669, 0.2
    %vm721 = vcmp.eq.s32.totalorder %v28, 9
    %v722 = vsel %vm721, %v720, 0.0
    %v723 = vadd.f32 %v645, %v722
    %v724 = vsub.f32 1.0, %v719
    %725 = vrot.lane.b32.xlu0 %v646, 116
    %v726 = vpop.permute.xlu0 %725
    %v728 = vmul.f32 %v724, %v726
    %v729 = vsel %vm44, %v728, 0.0
    %730 = vadd.xlane.f32.xlu0 %v729
    %v731 = vpop.xlane.xlu0 %730
    %v732 = vrot.slane %v731, 4
    %v733 = vadd.f32 %v731, %v732
    %v734 = vrot.slane %v733, 2
    %v735 = vadd.f32 %v733, %v734
    %v736 = vrot.slane %v735, 1
    %v737 = vadd.f32 %v735, %v736
    %s738 = vtos %v737
    %v739 = vstv %s738
    %v740 = vmul.f32 %v739, 0.2
    %vm741 = vcmp.eq.s32.totalorder %v28, 10
    %v742 = vsel %vm741, %v740, 0.0
    %v743 = vadd.f32 %v723, %v742
    %744 = vrot.lane.b32.xlu0 %v646, 127
    %v745 = vpop.permute.xlu0 %744
    %v747 = vsub.f32 %v646, %v745
    %v748 = vand.u32 2147483647, %v747
    %v749 = vmul.f32 %v748, %v649
    %751 = vrot.lane.b32.xlu0 %v749, 120
    %v752 = vpop.permute.xlu0 %751
    %v754 = vsel %vm44, %v752, 0.0
    %755 = vadd.xlane.f32.xlu0 %v754
    %v756 = vpop.xlane.xlu0 %755
    %v757 = vrot.slane %v756, 4
    %v758 = vadd.f32 %v756, %v757
    %v759 = vrot.slane %v758, 2
    %v760 = vadd.f32 %v758, %v759
    %v761 = vrot.slane %v760, 1
    %v762 = vadd.f32 %v760, %v761
    %s763 = vtos %v762
    %v764 = vstv %s763
    %v765 = vmul.f32 %v764, 0.2
    %vm766 = vcmp.eq.s32.totalorder %v28, 11
    %v767 = vsel %vm766, %v765, 0.0
    %v768 = vadd.f32 %v743, %v767
    %v769 = vmul.f32 %v747, %v747
    %v770 = vmul.f32 %v769, %v649
    %772 = vrot.lane.b32.xlu0 %v770, 120
    %v773 = vpop.permute.xlu0 %772
    %v775 = vsel %vm44, %v773, 0.0
    %776 = vadd.xlane.f32.xlu0 %v775
    %v777 = vpop.xlane.xlu0 %776
    %v778 = vrot.slane %v777, 4
    %v779 = vadd.f32 %v777, %v778
    %v780 = vrot.slane %v779, 2
    %v781 = vadd.f32 %v779, %v780
    %v782 = vrot.slane %v781, 1
    %v783 = vadd.f32 %v781, %v782
    %s784 = vtos %v783
    %v785 = vstv %s784
    %v786 = vmul.f32 %v785, 0.2
    %vm787 = vcmp.eq.s32.totalorder %v28, 12
    %v788 = vsel %vm787, %v786, 0.0
    %v789 = vadd.f32 %v768, %v788
    %790 = vrot.lane.b32.xlu0 %v646, 126
    %v791 = vpop.permute.xlu0 %790
    %v793 = vmul.f32 %v748, %v791
    %795 = vrot.lane.b32.xlu0 %v793, 118
    %v796 = vpop.permute.xlu0 %795
    %v798 = vsel %vm44, %v796, 0.0
    %799 = vadd.xlane.f32.xlu0 %v798
    %v800 = vpop.xlane.xlu0 %799
    %v801 = vrot.slane %v800, 4
    %v802 = vadd.f32 %v800, %v801
    %v803 = vrot.slane %v802, 2
    %v804 = vadd.f32 %v802, %v803
    %v805 = vrot.slane %v804, 1
    %v806 = vadd.f32 %v804, %v805
    %s807 = vtos %v806
    %v808 = vstv %s807
    %v809 = vmul.f32 %v808, 0.2
    %vm810 = vcmp.eq.s32.totalorder %v28, 13
    %v811 = vsel %vm810, %v809, 0.0
    %v812 = vadd.f32 %v789, %v811
    %v813 = vmul.f32 %v769, %v791
    %815 = vrot.lane.b32.xlu0 %v813, 118
    %v816 = vpop.permute.xlu0 %815
    %v818 = vsel %vm44, %v816, 0.0
    %819 = vadd.xlane.f32.xlu0 %v818
    %v820 = vpop.xlane.xlu0 %819
    %v821 = vrot.slane %v820, 4
    %v822 = vadd.f32 %v820, %v821
    %v823 = vrot.slane %v822, 2
    %v824 = vadd.f32 %v822, %v823
    %v825 = vrot.slane %v824, 1
    %v826 = vadd.f32 %v824, %v825
    %s827 = vtos %v826
    %v828 = vstv %s827
    %v829 = vmul.f32 %v828, 0.2
    %vm830 = vcmp.eq.s32.totalorder %v28, 14
    %v831 = vsel %vm830, %v829, 0.0
    %v832 = vadd.f32 %v812, %v831
    %833 = vst [vmem:[#allocation2] sm:$0x1] %v832
    // Predicated region
    $region30: #{tpu_custom_call.1} parent=1 // pred_check
      _
    $region31: #{tpu_custom_call.1} parent=1 // pred_check_branch
      %835 = sbr.rel (0) target = $region33
    $region32: #{tpu_custom_call.1} parent=1 // pred_region
      %s837 = ssub.s32 16, 16
      %838 = vsyncadd [#allocation3], %s837
      %s840 = sshll.u32 [#allocation2], 4
      %s841 = int_to_ptr.vmem [resolvable:$true] %s840
      %843 = dma.vmem_to_hbm [thread:$0]  %s841, 16, %s7, [#allocation3]
    $region33: #{tpu_custom_call.1} parent=1 // pred_fallthru
      _
    // Predicated region
    $region34: #{tpu_custom_call.1} parent=1 // pred_check
      _
    $region35: #{tpu_custom_call.1} parent=1 // pred_check_branch
      %845 = sbr.rel (0) target = $region37
    $region36: #{tpu_custom_call.1} parent=1 // pred_region
      %846 = dma.done [#allocation3], 16
    $region37: #{tpu_custom_call.1} parent=1 // pred_fallthru
      _
    %847 = vsyncpa [#allocation3], 1

</llo_original>
